<compile_context>
chip_gen: v7x
topology: tpu7x:2x2x1
jax: 0.10.0
libtpu: 0.0.40
codegen_flags: <defaults>
</compile_context>

<pallas_src>
import functools

import jax
import jax.numpy as jnp
from jax.experimental import pallas as pl
from jax.experimental.pallas import tpu as pltpu

NUM_LAYERS = 8
COMPUTE_DTYPE = jnp.bfloat16


# ------------------------------ kernels -------------------------------------

def mlp_resident_kernel(x_ref, w_ref, b_ref, o_ref):
    """All 8 layers fused in one grid step; whole weight stack resident in VMEM.

    x_ref : (Bt, D)        input tile (compute dtype)
    w_ref : (8, D, D)      weights, (in, out) layout, grid-invariant
    b_ref : (8, 1, D) f32  biases, grid-invariant
    o_ref : (Bt, D)        output tile
    """
    cd = w_ref.dtype
    h = x_ref[...]
    for l in range(NUM_LAYERS):
        acc = jnp.dot(h, w_ref[l], preferred_element_type=jnp.float32) + b_ref[l]
        if l == NUM_LAYERS - 1:
            o_ref[...] = acc.astype(o_ref.dtype)
        else:
            h = acc.astype(cd)


def mlp_streamed_kernel(x_ref, w_ref, b_ref, o_ref, act_ref):
    """Fallback for large D: stream one layer's weights per grid step.

    Grid = (batch_tiles, NUM_LAYERS); the layer axis is "arbitrary" and the
    activation lives in a persistent (bf16) VMEM scratch across layer steps.

    x_ref  : (Bt, D)        input tile (read at layer 0 only)
    w_ref  : (1, D, D)      this layer's weight, (in, out) layout
    b_ref  : (8, 1, D) f32  whole bias stack, grid-invariant
    o_ref  : (Bt, D)        output tile (written at the last layer only)
    act_ref: (Bt, D)        persistent inter-layer activation scratch
    """
    layer = pl.program_id(1)
    last = pl.num_programs(1) - 1

    @pl.when(layer == 0)
    def _():
        act_ref[...] = x_ref[...]

    acc = (jnp.dot(act_ref[...], w_ref[0], preferred_element_type=jnp.float32)
           + b_ref[layer])

    @pl.when(layer != last)
    def _():
        act_ref[...] = acc.astype(act_ref.dtype)

    @pl.when(layer == last)
    def _():
        o_ref[...] = acc.astype(o_ref.dtype)


# ------------------------------ planning ------------------------------------

def _vmem_capacity_bytes():
    try:
        return int(pltpu.get_tpu_info().vmem_capacity_bytes)
    except Exception:
        return 64 << 20  # conservative: v7x per-TensorCore VMEM


def _choose_plan(B, D, w_itemsize, out_itemsize):
    """Pick (block_b, resident, vmem_limit_bytes) from shapes & VMEM capacity."""
    cap = _vmem_capacity_bytes()
    w_all = NUM_LAYERS * D * D * w_itemsize      # full weight stack, resident once
    bias = NUM_LAYERS * 8 * D * 4                # (8,1,D) f32, sublane-padded

    def tiles(bb):  # double-buffered input + output activation tiles
        return 2 * bb * D * w_itemsize + 2 * bb * D * out_itemsize

    def clamp_bb(bb):
        # keep >= 2 batch tiles where B allows (shards across v7x's two TCs)
        while bb > 128 and -(-B // bb) < 2:
            bb //= 2
        return bb

    # Fast path: whole 8-layer weight stack resident in VMEM.
    bb = clamp_bb(256)
    est = w_all + bias + tiles(bb)
    if est <= int(0.45 * cap):
        return bb, True, min(int(0.9 * cap), max(32 << 20, est + (16 << 20)))

    # Fallback: stream one layer's (double-buffered) weights per grid step with
    # a big batch tile so the pipeline is MXU-bound rather than weight-DMA-bound.
    bb = clamp_bb(512)

    def streamed_est(bb_):
        return 2 * D * D * w_itemsize + bias + tiles(bb_) + bb_ * D * w_itemsize

    est = streamed_est(bb)
    while bb > 128 and est > int(0.7 * cap):
        bb //= 2
        est = streamed_est(bb)
    return bb, False, min(int(0.9 * cap), max(32 << 20, est + (16 << 20)))


# ------------------------------ wrappers ------------------------------------

@functools.partial(
    jax.jit, static_argnames=("block_b", "resident", "out_dtype", "vmem_limit"))
def _mlp_forward_padded(x, w_stack, b_stack, *, block_b, resident, out_dtype,
                        vmem_limit):
    """x: (B, D) with B % block_b == 0; w_stack: (8, D, D) (in,out); b_stack: (8, D)."""
    B, D = x.shape
    nb = B // block_b
    b3 = b_stack.reshape(NUM_LAYERS, 1, D).astype(jnp.float32)
    x_c = x.astype(w_stack.dtype)  # half-size x tile DMA when weights are bf16

    if resident:
        kernel = mlp_resident_kernel
        grid_spec = pltpu.PrefetchScalarGridSpec(
            num_scalar_prefetch=0,
            grid=(nb,),
            in_specs=[
                pl.BlockSpec((block_b, D), lambda i: (i, 0)),
                # grid-invariant -> fetched from HBM exactly once
                pl.BlockSpec((NUM_LAYERS, D, D), lambda i: (0, 0, 0)),
                pl.BlockSpec((NUM_LAYERS, 1, D), lambda i: (0, 0, 0)),
            ],
            out_specs=pl.BlockSpec((block_b, D), lambda i: (i, 0)),
        )
        dims = ("parallel",)
    else:
        kernel = mlp_streamed_kernel
        grid_spec = pltpu.PrefetchScalarGridSpec(
            num_scalar_prefetch=0,
            grid=(nb, NUM_LAYERS),  # batch outer (parallel), layer inner (arbitrary)
            in_specs=[
                pl.BlockSpec((block_b, D), lambda i, l: (i, 0)),
                # stream one layer's weights per step (pipeline prefetches l+1)
                pl.BlockSpec((1, D, D), lambda i, l: (l, 0, 0)),
                # whole bias stack resident (grid-invariant)
                pl.BlockSpec((NUM_LAYERS, 1, D), lambda i, l: (0, 0, 0)),
            ],
            out_specs=pl.BlockSpec((block_b, D), lambda i, l: (i, 0)),
            scratch_shapes=[pltpu.VMEM((block_b, D), w_stack.dtype)],
        )
        dims = ("parallel", "arbitrary")

    return pl.pallas_call(
        kernel,
        out_shape=jax.ShapeDtypeStruct((B, D), out_dtype),
        grid_spec=grid_spec,
        compiler_params=pltpu.CompilerParams(
            dimension_semantics=dims,
            vmem_limit_bytes=vmem_limit,
        ),
    )(x_c, w_stack, b3)


def mlp_forward(x, w_stack, b_stack, *, block_b=None):
    """Forward pass; arbitrary batch via padding. flatten(.,1) on 2-D is identity."""
    B, D = x.shape
    out_dtype = jnp.dtype(x.dtype)
    bb, resident, vmem_limit = _choose_plan(
        B, D, jnp.dtype(w_stack.dtype).itemsize, out_dtype.itemsize)
    if block_b is not None:
        bb = block_b
    nb = -(-B // bb)
    Bp = nb * bb
    if Bp != B:
        x = jnp.pad(x, ((0, Bp - B), (0, 0)))
    out = _mlp_forward_padded(x, w_stack, b_stack, block_b=bb, resident=resident,
                              out_dtype=out_dtype, vmem_limit=vmem_limit)
    if Bp != B:
        out = out[:B]
    return out.reshape(B, -1)


# ------------------------------ params / reference --------------------------

def init_params(key, dim, weight_dtype=COMPUTE_DTYPE):
    """PyTorch-style Linear init: U(-1/sqrt(dim), 1/sqrt(dim)).

    Weights are pre-transposed to (in, out) and cast to `weight_dtype`
    (bf16 = MXU-native; pass jnp.float32 for bit-closer-to-PyTorch numerics).
    Biases stay f32.
    """
    bound = 1.0 / jnp.sqrt(jnp.float32(dim))
    ws, bs = [], []
    for _ in range(NUM_LAYERS):
        kw, kb, key = jax.random.split(key, 3)
        w_oi = jax.random.uniform(kw, (dim, dim), jnp.float32, -bound, bound)
        b = jax.random.uniform(kb, (dim,), jnp.float32, -bound, bound)
        ws.append(w_oi.T.astype(weight_dtype))  # (in, out)
        bs.append(b)
    return jnp.stack(ws, 0), jnp.stack(bs, 0)


def reference_forward(x, w_stack, b_stack):
    """Pure-JAX reference with the kernel's numerics (bf16 matmul, f32 accumulate)."""
    cd = w_stack.dtype
    h = x.astype(cd)
    out = None
    for l in range(NUM_LAYERS):
        out = jnp.dot(h, w_stack[l], preferred_element_type=jnp.float32) + b_stack[l]
        h = out.astype(cd)
    return out.astype(x.dtype).reshape(x.shape[0], -1)


# ------------------------------ demo ----------------------------------------

if __name__ == "__main__":
    # Small shapes consistent with the module (dim reduced 1024 -> 256 for the
    # demo); batch=256 gives 2 parallel batch tiles (both v7x TCs busy).
    batch, dim = 256, 256
    key = jax.random.PRNGKey(0)
    kx, kp = jax.random.split(key)

    x = jax.random.normal(kx, (batch, dim), jnp.float32)
    w_stack, b_stack = init_params(kp, dim)
    y_ref = reference_forward(x, w_stack, b_stack)

    # Default plan: resident-weight fast path at this size.
    y = jax.block_until_ready(mlp_forward(x, w_stack, b_stack))
    assert y.shape == (batch, dim)
    assert jnp.allclose(y, y_ref, atol=1e-2, rtol=1e-2), "resident path mismatch"

    # Also exercise the streamed fallback path (used when weights exceed VMEM).
    y_s = jax.block_until_ready(
        _mlp_forward_padded(x, w_stack, b_stack, block_b=128, resident=False,
                            out_dtype=jnp.dtype(jnp.float32),
                            vmem_limit=32 << 20))
    assert jnp.allclose(y_s, y_ref, atol=1e-2, rtol=1e-2), "streamed path mismatch"

    print("KERNEL_OK")
</pallas_src>

<mosaic_0001>
module attributes {stable_mosaic.version = 11 : i64} {
  func.func @mlp_resident_kernel(%arg0: i32, %arg1: memref<128x256xbf16, #tpu.memory_space<vmem>>, %arg2: memref<8x256x256xbf16, #tpu.memory_space<vmem>>, %arg3: memref<8x1x256xf32, #tpu.memory_space<vmem>>, %arg4: memref<128x256xf32, #tpu.memory_space<vmem>>) attributes {dimension_semantics = [#tpu.dimension_semantics<parallel>], iteration_bounds = array<i64: 2>, scalar_prefetch = 0 : i64, scratch_operands = 0 : i64, tpu.core_type = #tpu.core_type<tc>, window_params = [{transform_indices = @transform_0, window_bounds = array<i64: 128, 256>}, {pipeline_mode = #tpu.pipeline_mode<synchronous>, transform_indices = @transform_1, window_bounds = array<i64: 8, 256, 256>}, {pipeline_mode = #tpu.pipeline_mode<synchronous>, transform_indices = @transform_2, window_bounds = array<i64: 8, 1, 256>}, {transform_indices = @transform_3, window_bounds = array<i64: 128, 256>}]} {
    %c0 = arith.constant 0 : index
    %c0_0 = arith.constant 0 : index
    %0 = vector.load %arg1[%c0, %c0_0] : memref<128x256xbf16, #tpu.memory_space<vmem>>, vector<128x256xbf16>
    %c0_1 = arith.constant 0 : index
    %c0_2 = arith.constant 0 : index
    %c0_3 = arith.constant 0 : index
    %1 = vector.load %arg2[%c0_1, %c0_2, %c0_3] : memref<8x256x256xbf16, #tpu.memory_space<vmem>>, vector<1x256x256xbf16>
    %2 = vector.shape_cast %1 : vector<1x256x256xbf16> to vector<256x256xbf16>
    %cst = arith.constant dense<0.000000e+00> : vector<128x256xf32>
    %3 = tpu.matmul %0, %2, %cst {dimension_numbers = #tpu.dot_dimension_numbers<[1], [0], [0], [1], [0, 0, 1, 1], [], []>} : vector<128x256xbf16>, vector<256x256xbf16>, vector<128x256xf32> -> vector<128x256xf32>
    %c0_4 = arith.constant 0 : index
    %c0_5 = arith.constant 0 : index
    %c0_6 = arith.constant 0 : index
    %4 = vector.load %arg3[%c0_4, %c0_5, %c0_6] : memref<8x1x256xf32, #tpu.memory_space<vmem>>, vector<1x1x256xf32>
    %5 = vector.shape_cast %4 : vector<1x1x256xf32> to vector<1x256xf32>
    %6 = vector.broadcast %5 : vector<1x256xf32> to vector<128x256xf32>
    %7 = arith.addf %3, %6 : vector<128x256xf32>
    %8 = arith.truncf %7 : vector<128x256xf32> to vector<128x256xbf16>
    %c1 = arith.constant 1 : index
    %c0_7 = arith.constant 0 : index
    %c0_8 = arith.constant 0 : index
    %9 = vector.load %arg2[%c1, %c0_7, %c0_8] : memref<8x256x256xbf16, #tpu.memory_space<vmem>>, vector<1x256x256xbf16>
    %10 = vector.shape_cast %9 : vector<1x256x256xbf16> to vector<256x256xbf16>
    %cst_9 = arith.constant dense<0.000000e+00> : vector<128x256xf32>
    %11 = tpu.matmul %8, %10, %cst_9 {dimension_numbers = #tpu.dot_dimension_numbers<[1], [0], [0], [1], [0, 0, 1, 1], [], []>} : vector<128x256xbf16>, vector<256x256xbf16>, vector<128x256xf32> -> vector<128x256xf32>
    %c1_10 = arith.constant 1 : index
    %c0_11 = arith.constant 0 : index
    %c0_12 = arith.constant 0 : index
    %12 = vector.load %arg3[%c1_10, %c0_11, %c0_12] : memref<8x1x256xf32, #tpu.memory_space<vmem>>, vector<1x1x256xf32>
    %13 = vector.shape_cast %12 : vector<1x1x256xf32> to vector<1x256xf32>
    %14 = vector.broadcast %13 : vector<1x256xf32> to vector<128x256xf32>
    %15 = arith.addf %11, %14 : vector<128x256xf32>
    %16 = arith.truncf %15 : vector<128x256xf32> to vector<128x256xbf16>
    %c2 = arith.constant 2 : index
    %c0_13 = arith.constant 0 : index
    %c0_14 = arith.constant 0 : index
    %17 = vector.load %arg2[%c2, %c0_13, %c0_14] : memref<8x256x256xbf16, #tpu.memory_space<vmem>>, vector<1x256x256xbf16>
    %18 = vector.shape_cast %17 : vector<1x256x256xbf16> to vector<256x256xbf16>
    %cst_15 = arith.constant dense<0.000000e+00> : vector<128x256xf32>
    %19 = tpu.matmul %16, %18, %cst_15 {dimension_numbers = #tpu.dot_dimension_numbers<[1], [0], [0], [1], [0, 0, 1, 1], [], []>} : vector<128x256xbf16>, vector<256x256xbf16>, vector<128x256xf32> -> vector<128x256xf32>
    %c2_16 = arith.constant 2 : index
    %c0_17 = arith.constant 0 : index
    %c0_18 = arith.constant 0 : index
    %20 = vector.load %arg3[%c2_16, %c0_17, %c0_18] : memref<8x1x256xf32, #tpu.memory_space<vmem>>, vector<1x1x256xf32>
    %21 = vector.shape_cast %20 : vector<1x1x256xf32> to vector<1x256xf32>
    %22 = vector.broadcast %21 : vector<1x256xf32> to vector<128x256xf32>
    %23 = arith.addf %19, %22 : vector<128x256xf32>
    %24 = arith.truncf %23 : vector<128x256xf32> to vector<128x256xbf16>
    %c3 = arith.constant 3 : index
    %c0_19 = arith.constant 0 : index
    %c0_20 = arith.constant 0 : index
    %25 = vector.load %arg2[%c3, %c0_19, %c0_20] : memref<8x256x256xbf16, #tpu.memory_space<vmem>>, vector<1x256x256xbf16>
    %26 = vector.shape_cast %25 : vector<1x256x256xbf16> to vector<256x256xbf16>
    %cst_21 = arith.constant dense<0.000000e+00> : vector<128x256xf32>
    %27 = tpu.matmul %24, %26, %cst_21 {dimension_numbers = #tpu.dot_dimension_numbers<[1], [0], [0], [1], [0, 0, 1, 1], [], []>} : vector<128x256xbf16>, vector<256x256xbf16>, vector<128x256xf32> -> vector<128x256xf32>
    %c3_22 = arith.constant 3 : index
    %c0_23 = arith.constant 0 : index
    %c0_24 = arith.constant 0 : index
    %28 = vector.load %arg3[%c3_22, %c0_23, %c0_24] : memref<8x1x256xf32, #tpu.memory_space<vmem>>, vector<1x1x256xf32>
    %29 = vector.shape_cast %28 : vector<1x1x256xf32> to vector<1x256xf32>
    %30 = vector.broadcast %29 : vector<1x256xf32> to vector<128x256xf32>
    %31 = arith.addf %27, %30 : vector<128x256xf32>
    %32 = arith.truncf %31 : vector<128x256xf32> to vector<128x256xbf16>
    %c4 = arith.constant 4 : index
    %c0_25 = arith.constant 0 : index
    %c0_26 = arith.constant 0 : index
    %33 = vector.load %arg2[%c4, %c0_25, %c0_26] : memref<8x256x256xbf16, #tpu.memory_space<vmem>>, vector<1x256x256xbf16>
    %34 = vector.shape_cast %33 : vector<1x256x256xbf16> to vector<256x256xbf16>
    %cst_27 = arith.constant dense<0.000000e+00> : vector<128x256xf32>
    %35 = tpu.matmul %32, %34, %cst_27 {dimension_numbers = #tpu.dot_dimension_numbers<[1], [0], [0], [1], [0, 0, 1, 1], [], []>} : vector<128x256xbf16>, vector<256x256xbf16>, vector<128x256xf32> -> vector<128x256xf32>
    %c4_28 = arith.constant 4 : index
    %c0_29 = arith.constant 0 : index
    %c0_30 = arith.constant 0 : index
    %36 = vector.load %arg3[%c4_28, %c0_29, %c0_30] : memref<8x1x256xf32, #tpu.memory_space<vmem>>, vector<1x1x256xf32>
    %37 = vector.shape_cast %36 : vector<1x1x256xf32> to vector<1x256xf32>
    %38 = vector.broadcast %37 : vector<1x256xf32> to vector<128x256xf32>
    %39 = arith.addf %35, %38 : vector<128x256xf32>
    %40 = arith.truncf %39 : vector<128x256xf32> to vector<128x256xbf16>
    %c5 = arith.constant 5 : index
    %c0_31 = arith.constant 0 : index
    %c0_32 = arith.constant 0 : index
    %41 = vector.load %arg2[%c5, %c0_31, %c0_32] : memref<8x256x256xbf16, #tpu.memory_space<vmem>>, vector<1x256x256xbf16>
    %42 = vector.shape_cast %41 : vector<1x256x256xbf16> to vector<256x256xbf16>
    %cst_33 = arith.constant dense<0.000000e+00> : vector<128x256xf32>
    %43 = tpu.matmul %40, %42, %cst_33 {dimension_numbers = #tpu.dot_dimension_numbers<[1], [0], [0], [1], [0, 0, 1, 1], [], []>} : vector<128x256xbf16>, vector<256x256xbf16>, vector<128x256xf32> -> vector<128x256xf32>
    %c5_34 = arith.constant 5 : index
    %c0_35 = arith.constant 0 : index
    %c0_36 = arith.constant 0 : index
    %44 = vector.load %arg3[%c5_34, %c0_35, %c0_36] : memref<8x1x256xf32, #tpu.memory_space<vmem>>, vector<1x1x256xf32>
    %45 = vector.shape_cast %44 : vector<1x1x256xf32> to vector<1x256xf32>
    %46 = vector.broadcast %45 : vector<1x256xf32> to vector<128x256xf32>
    %47 = arith.addf %43, %46 : vector<128x256xf32>
    %48 = arith.truncf %47 : vector<128x256xf32> to vector<128x256xbf16>
    %c6 = arith.constant 6 : index
    %c0_37 = arith.constant 0 : index
    %c0_38 = arith.constant 0 : index
    %49 = vector.load %arg2[%c6, %c0_37, %c0_38] : memref<8x256x256xbf16, #tpu.memory_space<vmem>>, vector<1x256x256xbf16>
    %50 = vector.shape_cast %49 : vector<1x256x256xbf16> to vector<256x256xbf16>
    %cst_39 = arith.constant dense<0.000000e+00> : vector<128x256xf32>
    %51 = tpu.matmul %48, %50, %cst_39 {dimension_numbers = #tpu.dot_dimension_numbers<[1], [0], [0], [1], [0, 0, 1, 1], [], []>} : vector<128x256xbf16>, vector<256x256xbf16>, vector<128x256xf32> -> vector<128x256xf32>
    %c6_40 = arith.constant 6 : index
    %c0_41 = arith.constant 0 : index
    %c0_42 = arith.constant 0 : index
    %52 = vector.load %arg3[%c6_40, %c0_41, %c0_42] : memref<8x1x256xf32, #tpu.memory_space<vmem>>, vector<1x1x256xf32>
    %53 = vector.shape_cast %52 : vector<1x1x256xf32> to vector<1x256xf32>
    %54 = vector.broadcast %53 : vector<1x256xf32> to vector<128x256xf32>
    %55 = arith.addf %51, %54 : vector<128x256xf32>
    %56 = arith.truncf %55 : vector<128x256xf32> to vector<128x256xbf16>
    %c7 = arith.constant 7 : index
    %c0_43 = arith.constant 0 : index
    %c0_44 = arith.constant 0 : index
    %57 = vector.load %arg2[%c7, %c0_43, %c0_44] : memref<8x256x256xbf16, #tpu.memory_space<vmem>>, vector<1x256x256xbf16>
    %58 = vector.shape_cast %57 : vector<1x256x256xbf16> to vector<256x256xbf16>
    %cst_45 = arith.constant dense<0.000000e+00> : vector<128x256xf32>
    %59 = tpu.matmul %56, %58, %cst_45 {dimension_numbers = #tpu.dot_dimension_numbers<[1], [0], [0], [1], [0, 0, 1, 1], [], []>} : vector<128x256xbf16>, vector<256x256xbf16>, vector<128x256xf32> -> vector<128x256xf32>
    %c7_46 = arith.constant 7 : index
    %c0_47 = arith.constant 0 : index
    %c0_48 = arith.constant 0 : index
    %60 = vector.load %arg3[%c7_46, %c0_47, %c0_48] : memref<8x1x256xf32, #tpu.memory_space<vmem>>, vector<1x1x256xf32>
    %61 = vector.shape_cast %60 : vector<1x1x256xf32> to vector<1x256xf32>
    %62 = vector.broadcast %61 : vector<1x256xf32> to vector<128x256xf32>
    %63 = arith.addf %59, %62 : vector<128x256xf32>
    %c0_49 = arith.constant 0 : index
    %c0_50 = arith.constant 0 : index
    %64 = vector.load %arg4[%c0_49, %c0_50] : memref<128x256xf32, #tpu.memory_space<vmem>>, vector<128x256xf32>
    tpu.vector_store %arg4[%c0_49, %c0_50], %63 {strides = array<i32>} : memref<128x256xf32, #tpu.memory_space<vmem>>, vector<128x256xf32>,
    return
  }
  func.func @transform_0(%arg0: i32) -> (i32, i32) {
    %c0_i32 = arith.constant 0 : i32
    %c0_i32_0 = arith.constant 0 : i32
    return %arg0, %c0_i32 : i32, i32
  }
  func.func @transform_1(%arg0: i32) -> (i32, i32, i32) {
    %c0_i32 = arith.constant 0 : i32
    %c0_i32_0 = arith.constant 0 : i32
    %c0_i32_1 = arith.constant 0 : i32
    %c0_i32_2 = arith.constant 0 : i32
    return %c0_i32, %c0_i32_0, %c0_i32_1 : i32, i32, i32
  }
  func.func @transform_2(%arg0: i32) -> (i32, i32, i32) {
    %c0_i32 = arith.constant 0 : i32
    %c0_i32_0 = arith.constant 0 : i32
    %c0_i32_1 = arith.constant 0 : i32
    %c0_i32_2 = arith.constant 0 : i32
    return %c0_i32, %c0_i32_0, %c0_i32_1 : i32, i32, i32
  }
  func.func @transform_3(%arg0: i32) -> (i32, i32) {
    %c0_i32 = arith.constant 0 : i32
    %c0_i32_0 = arith.constant 0 : i32
    return %arg0, %c0_i32 : i32, i32
  }
}

</mosaic_0001>

<llo_original>
// kernel: _mlp_forward_padded.1
$region0: #{_mlp_forward_padded.1}
  #allocation0 [shape = 'u32[]', space=smem, size = 0x4, offset = 0x4, fixed_abs, tag = 'smem constant byte address 0x4 - core index']
  #allocation1 [shape = 'u32[144,128]{1,0:T(1,128)}', space=vmem, size = 0x12000, scoped, tag = 'internal scratch']
  %s0 = inlined_call_operand.vmem [shape: bf16[256,256], index: 0, kind: input, shape index: {}]
  %s1 = inlined_call_operand.hbm [shape: bf16[8,256,256], index: 1, kind: input, shape index: {}]
  %s2 = inlined_call_operand.vmem [shape: f32[8,1,256], index: 2, kind: input, shape index: {}]
  %s3 = inlined_call_operand.hbm [shape: f32[256,256], index: 3, kind: output, shape index: {}]
  %s4 = sld [smem:[#allocation0]]
  $region49: #{_mlp_forward_padded.1} parent=0
    _
  %s6 = ssub.s32 1, %s4
  %s7 = scalar_select 0, %s6, %s4
  $region1: #{_mlp_forward_padded.1} parent=0
    #allocation2 [shape = 'u8[1048576]{0}', space=vmem, size = 0x100000, scoped, tag = 'input window, operand 1, single buffered']
    #allocation3 [shape = 's32[2]{0}', space=sflag, size = 0x8, scoped, tag = 'scoped memory for _mlp_forward_padded.1']
    #allocation4 [shape = 's32[2]{0}', space=sflag, size = 0x8, scoped, tag = 'scoped memory for _mlp_forward_padded.1']
    #allocation5 [shape = 'u8[262144]{0}', space=vmem, size = 0x40000, scoped, tag = 'output window, operand 0']
    %8 = vsyncpa [#allocation3], 0
    %9 = vsyncpa [#allocation4], 0
    %s10 = scalar_lea.sflag [#allocation4], 1
    %11 = vsyncpa %s10, 0
    loop: start=0, step=1, limit=4
    $region2: #{_mlp_forward_padded.1} parent=1 // loop_pre_header
      _
    $region3: #{_mlp_forward_padded.1} parent=1 // loop_header
      %s13 = sphi 0, %s17
      %p14 = scmp.ge.s32.totalorder %s13, 4
      %s23 = sphi 0, %s25
      %s26 = sphi 0, %s23
      %s27 = sphi 0, %s26
      %s43 = sphi 0, %s27
      %s47 = sphi 0, %s47
      %s49 = sphi 0, %s47
      %s50 = sphi 0, %s49
      %s64 = sphi 0, %s50
      %s68 = sphi 0, %s68
      %s70 = sphi 0, %s68
      %s71 = sphi 0, %s70
      %s85 = sphi 0, %s71
      %s91 = sphi 0, %s93
      %s94 = sphi 0, %s91
      %s95 = sphi 0, %s94
      %s111 = sphi 0, %s95
    $region4: #{_mlp_forward_padded.1} parent=1 // loop_header_branch
      %16 = sbr.rel (%p14) target = $region8
    $region5: #{_mlp_forward_padded.1} parent=1 // loop_body
      %s18 = ssub.s32 %s13, 1
      %s19 = ssub.s32 %s13, 2
      %s20 = sadd.s32 %s13, 1
      %s21 = ssub.s32 %s13, %s20
      %p22 = scmp.eq.s32.totalorder %s21, 0
      %s24 = sadd.s32 %s23, 1
      %s25 = scalar_select %p22, %s23, %s24
      %p28 = pneg %p22
      %p29 = scmp.eq.s32.totalorder %s13, 1
      %p30 = por %p28, %p29
      %p31 = scmp.ne.s32.totalorder %s23, %s26
      %p32 = scmp.eq.s32.totalorder %s13, 0
      %p33 = por %p31, %p32
      %p34 = scmp.ne.s32.totalorder %s23, %s26
      %p35 = scmp.eq.s32.totalorder %s18, 1
      %p36 = por %p34, %p35
      %p37 = scmp.ne.s32.totalorder %s26, %s27
      %p38 = scmp.eq.s32.totalorder %s18, 0
      %p39 = por %p37, %p38
      %p40 = scmp.ne.s32.totalorder %s26, %s27
      %p41 = scmp.eq.s32.totalorder %s19, 1
      %p42 = por %p40, %p41
      %p44 = scmp.ne.s32.totalorder %s27, %s43
      %p45 = scmp.eq.s32.totalorder %s19, 0
      %p46 = por %p44, %p45
      %s48 = sadd.s32 %s47, 1
      %p51 = scmp.eq.s32.totalorder %s13, 1
      %p52 = scmp.ne.s32.totalorder %s47, %s49
      %p53 = scmp.eq.s32.totalorder %s13, 0
      %p54 = por %p52, %p53
      %p55 = scmp.ne.s32.totalorder %s47, %s49
      %p56 = scmp.eq.s32.totalorder %s18, 1
      %p57 = por %p55, %p56
      %p58 = scmp.ne.s32.totalorder %s49, %s50
      %p59 = scmp.eq.s32.totalorder %s18, 0
      %p60 = por %p58, %p59
      %p61 = scmp.ne.s32.totalorder %s49, %s50
      %p62 = scmp.eq.s32.totalorder %s19, 1
      %p63 = por %p61, %p62
      %p65 = scmp.ne.s32.totalorder %s50, %s64
      %p66 = scmp.eq.s32.totalorder %s19, 0
      %p67 = por %p65, %p66
      %s69 = sadd.s32 %s68, 1
      %p72 = scmp.eq.s32.totalorder %s13, 1
      %p73 = scmp.ne.s32.totalorder %s68, %s70
      %p74 = scmp.eq.s32.totalorder %s13, 0
      %p75 = por %p73, %p74
      %p76 = scmp.ne.s32.totalorder %s68, %s70
      %p77 = scmp.eq.s32.totalorder %s18, 1
      %p78 = por %p76, %p77
      %p79 = scmp.ne.s32.totalorder %s70, %s71
      %p80 = scmp.eq.s32.totalorder %s18, 0
      %p81 = por %p79, %p80
      %p82 = scmp.ne.s32.totalorder %s70, %s71
      %p83 = scmp.eq.s32.totalorder %s19, 1
      %p84 = por %p82, %p83
      %p86 = scmp.ne.s32.totalorder %s71, %s85
      %p87 = scmp.eq.s32.totalorder %s19, 0
      %p88 = por %p86, %p87
      %s89 = ssub.s32 %s13, %s20
      %p90 = scmp.eq.s32.totalorder %s89, 0
      %s92 = sadd.s32 %s91, 1
      %s93 = scalar_select %p90, %s91, %s92
      %p96 = pneg %p90
      %p97 = scmp.eq.s32.totalorder %s13, 1
      %p98 = por %p96, %p97
      %p99 = scmp.ne.s32.totalorder %s91, %s94
      %p100 = scmp.eq.s32.totalorder %s13, 0
      %p101 = por %p99, %p100
      %p102 = scmp.ne.s32.totalorder %s91, %s94
      %p103 = scmp.eq.s32.totalorder %s18, 1
      %p104 = por %p102, %p103
      %p105 = scmp.ne.s32.totalorder %s94, %s95
      %p106 = scmp.eq.s32.totalorder %s18, 0
      %p107 = por %p105, %p106
      %p108 = scmp.ne.s32.totalorder %s94, %s95
      %p109 = scmp.eq.s32.totalorder %s19, 1
      %p110 = por %p108, %p109
      %p112 = scmp.ne.s32.totalorder %s95, %s111
      %p113 = scmp.eq.s32.totalorder %s19, 0
      %p114 = por %p112, %p113
      %p115 = scmp.le.s32.totalorder 1, %s13
      %p116 = scmp.lt.s32.totalorder %s13, 3
      %p117 = pnand %p115, %p116
      %p118 = pneg %p117
      // Predicated region
      $region9: #{_mlp_forward_padded.1} parent=5 // pred_check
        _
      $region10: #{_mlp_forward_padded.1} parent=5 // pred_check_branch
        %120 = sbr.rel (%p117) target = $region12
      $region11: #{_mlp_forward_padded.1} parent=5 // pred_region
        %s121 = ssub.s32 %s13, 1
        // Predicated region
        $region13: #{_mlp_forward_padded.1} parent=11 // pred_check
          %p122 = pneg %p60
        $region14: #{_mlp_forward_padded.1} parent=11 // pred_check_branch
          %124 = sbr.rel (%p122) target = $region16
        $region15: #{_mlp_forward_padded.1} parent=11 // pred_region
          %s126 = ssub.s32 32768, 32768
          %127 = vsyncadd [#allocation3], %s126
          %s128 = sshll.u32 [#allocation2], 4
          %s129 = int_to_ptr.vmem [resolvable:$true] %s128
          %134 = dma.hbm_to_vmem [thread:$0]  %s1, 32768, %s129, [#allocation3], 128, 128, 8
        $region16: #{_mlp_forward_padded.1} parent=11 // pred_fallthru
          _
        // Predicated region
        $region17: #{_mlp_forward_padded.1} parent=11 // pred_check
          %p135 = pneg %p81
        $region18: #{_mlp_forward_padded.1} parent=11 // pred_check_branch
          %137 = sbr.rel (%p135) target = $region20
        $region19: #{_mlp_forward_padded.1} parent=11 // pred_region
          _
        $region20: #{_mlp_forward_padded.1} parent=11 // pred_fallthru
          _
      $region12: #{_mlp_forward_padded.1} parent=5 // pred_fallthru
        _
      %p138 = scmp.lt.s32.totalorder %s13, 2
      // Predicated region
      $region21: #{_mlp_forward_padded.1} parent=5 // pred_check
        %p139 = pneg %p138
      $region22: #{_mlp_forward_padded.1} parent=5 // pred_check_branch
        %141 = sbr.rel (%p139) target = $region24
      $region23: #{_mlp_forward_padded.1} parent=5 // pred_region
        // Predicated region
        $region25: #{_mlp_forward_padded.1} parent=23 // pred_check
          %p142 = pneg %p33
        $region26: #{_mlp_forward_padded.1} parent=23 // pred_check_branch
          %144 = sbr.rel (%p142) target = $region28
        $region27: #{_mlp_forward_padded.1} parent=23 // pred_region
          %s145 = smul.u32 16, %s13
          %p146 = scmp.lt.s32.totalorder %s145, 31
          %s147 = scalar_select %p146, %s145, 31
          %s148 = smul.addr %s147, 2
          %s149 = smul.addr %s148, 4
          %s150 = scalar_lea.vmem %s0, %s149
          %s151 = smul.u32 16, %s13
        $region28: #{_mlp_forward_padded.1} parent=23 // pred_fallthru
          _
      $region24: #{_mlp_forward_padded.1} parent=5 // pred_fallthru
        _
      %p152 = scmp.le.s32.totalorder 1, %s13
      %p153 = scmp.lt.s32.totalorder %s13, 3
      %p154 = pnand %p152, %p153
      %p155 = pneg %p154
      // Predicated region
      $region29: #{_mlp_forward_padded.1} parent=5 // pred_check
        _
      $region30: #{_mlp_forward_padded.1} parent=5 // pred_check_branch
        %157 = sbr.rel (%p154) target = $region32
      $region31: #{_mlp_forward_padded.1} parent=5 // pred_region
        %s158 = ssub.s32 %s13, 1
        // Predicated region
        $region33: #{_mlp_forward_padded.1} parent=31 // pred_check
          %p159 = pneg %p60
        $region34: #{_mlp_forward_padded.1} parent=31 // pred_check_branch
          %161 = sbr.rel (%p159) target = $region36
        $region35: #{_mlp_forward_padded.1} parent=31 // pred_region
          %162 = dma.done [#allocation3], 32768
        $region36: #{_mlp_forward_padded.1} parent=31 // pred_fallthru
          _
        %s163 = smul.u32 16, %s18
        %p164 = scmp.lt.s32.totalorder %s163, 31
        %s165 = scalar_select %p164, %s163, 31
        %s166 = smul.addr %s165, 2
        %s167 = smul.addr %s166, 4
        %s168 = scalar_lea.vmem %s0, %s167
        %p169 = pneg %p39
        %p170 = pneg %p36
        %p171 = pneg %p60
        %p172 = pneg %p57
        %p173 = pneg %p81
        %p174 = pneg %p78
        %p175 = pneg %p107
        %p176 = pneg %p104
        %s177 = sand.u32 %s94, 1
        %s178 = scalar_lea.sflag [#allocation4], %s177
        %s179 = sand.u32 %s94, 1
        %s180 = smul.addr %s179, 256
        %s181 = scalar_lea.vmem [#allocation5], %s180
        %s182 = smul.u32 16, %s18
        %p183 = scmp.lt.s32.totalorder %s182, 31
        %s184 = scalar_select %p183, %s182, 31
        %s185 = smul.addr %s184, 2
        %s186 = smul.addr %s185, 4
        %s187 = scalar_lea.vmem %s0, %s186
        %s188 = smul.u32 16, %s18
        %s189 = smul.u32 16, %s18
        %v190 = vld [vmem:[%s187] sm:$0xff]
        %v191 = vld [vmem:[%s187 + $0x8] sm:$0xff]
        %v192 = vld [vmem:[%s187 + $0x10] sm:$0xff]
        %v193 = vld [vmem:[%s187 + $0x18] sm:$0xff]
        %v194 = vld [vmem:[%s187 + $0x20] sm:$0xff]
        %v195 = vld [vmem:[%s187 + $0x28] sm:$0xff]
        %v196 = vld [vmem:[%s187 + $0x30] sm:$0xff]
        %v197 = vld [vmem:[%s187 + $0x38] sm:$0xff]
        %v198 = vld [vmem:[%s187 + $0x40] sm:$0xff]
        %v199 = vld [vmem:[%s187 + $0x48] sm:$0xff]
        %v200 = vld [vmem:[%s187 + $0x50] sm:$0xff]
        %v201 = vld [vmem:[%s187 + $0x58] sm:$0xff]
        %v202 = vld [vmem:[%s187 + $0x60] sm:$0xff]
        %v203 = vld [vmem:[%s187 + $0x68] sm:$0xff]
        %v204 = vld [vmem:[%s187 + $0x70] sm:$0xff]
        %v205 = vld [vmem:[%s187 + $0x78] sm:$0xff]
        %v206 = vld [vmem:[#allocation2] sm:$0xff]
        %v207 = vld [vmem:[#allocation2 + $0x8] sm:$0xff]
        %v208 = vld [vmem:[#allocation2 + $0x10] sm:$0xff]
        %v209 = vld [vmem:[#allocation2 + $0x18] sm:$0xff]
        %v210 = vld [vmem:[#allocation2 + $0x20] sm:$0xff]
        %v211 = vld [vmem:[#allocation2 + $0x28] sm:$0xff]
        %v212 = vld [vmem:[#allocation2 + $0x30] sm:$0xff]
        %v213 = vld [vmem:[#allocation2 + $0x38] sm:$0xff]
        %v214 = vld [vmem:[#allocation2 + $0x40] sm:$0xff]
        %v215 = vld [vmem:[#allocation2 + $0x48] sm:$0xff]
        %v216 = vld [vmem:[#allocation2 + $0x50] sm:$0xff]
        %v217 = vld [vmem:[#allocation2 + $0x58] sm:$0xff]
        %v218 = vld [vmem:[#allocation2 + $0x60] sm:$0xff]
        %v219 = vld [vmem:[#allocation2 + $0x68] sm:$0xff]
        %v220 = vld [vmem:[#allocation2 + $0x70] sm:$0xff]
        %v221 = vld [vmem:[#allocation2 + $0x78] sm:$0xff]
        %v222 = vld [vmem:[#allocation2 + $0x80] sm:$0xff]
        %v223 = vld [vmem:[#allocation2 + $0x88] sm:$0xff]
        %v224 = vld [vmem:[#allocation2 + $0x90] sm:$0xff]
        %v225 = vld [vmem:[#allocation2 + $0x98] sm:$0xff]
        %v226 = vld [vmem:[#allocation2 + $0xa0] sm:$0xff]
        %v227 = vld [vmem:[#allocation2 + $0xa8] sm:$0xff]
        %v228 = vld [vmem:[#allocation2 + $0xb0] sm:$0xff]
        %v229 = vld [vmem:[#allocation2 + $0xb8] sm:$0xff]
        %v230 = vld [vmem:[#allocation2 + $0xc0] sm:$0xff]
        %v231 = vld [vmem:[#allocation2 + $0xc8] sm:$0xff]
        %v232 = vld [vmem:[#allocation2 + $0xd0] sm:$0xff]
        %v233 = vld [vmem:[#allocation2 + $0xd8] sm:$0xff]
        %v234 = vld [vmem:[#allocation2 + $0xe0] sm:$0xff]
        %v235 = vld [vmem:[#allocation2 + $0xe8] sm:$0xff]
        %v236 = vld [vmem:[#allocation2 + $0xf0] sm:$0xff]
        %v237 = vld [vmem:[#allocation2 + $0xf8] sm:$0xff]
        %v238 = vld [vmem:[%s2] sm:$0x3]
        %v240 = vlaneseq
        %v241 = vshrl.u32 %v240, 7
        %v242 = vsub.s32 0, %v241
        %v243 = vrot.slane %v238, %v242
        %v244 = vlaneseq
        %v245 = vshrl.u32 %v244, 7
        %v246 = vsub.s32 1, %v245
        %v247 = vrot.slane %v238, %v246
        %v266 = vunpack.c.l.b16 %v190
        %v267 = vunpack.c.h.b16 %v190
        %v268 = vunpack.c.l.b16 %v191
        %v269 = vunpack.c.h.b16 %v191
        %v270 = vunpack.c.l.b16 %v192
        %v271 = vunpack.c.h.b16 %v192
        %v272 = vunpack.c.l.b16 %v193
        %v273 = vunpack.c.h.b16 %v193
        %v274 = vunpack.c.l.b16 %v194
        %v275 = vunpack.c.h.b16 %v194
        %v276 = vunpack.c.l.b16 %v195
        %v277 = vunpack.c.h.b16 %v195
        %v278 = vunpack.c.l.b16 %v196
        %v279 = vunpack.c.h.b16 %v196
        %v280 = vunpack.c.l.b16 %v197
        %v281 = vunpack.c.h.b16 %v197
        %v282 = vunpack.c.l.b16 %v198
        %v283 = vunpack.c.h.b16 %v198
        %v284 = vunpack.c.l.b16 %v199
        %v285 = vunpack.c.h.b16 %v199
        %v286 = vunpack.c.l.b16 %v200
        %v287 = vunpack.c.h.b16 %v200
        %v288 = vunpack.c.l.b16 %v201
        %v289 = vunpack.c.h.b16 %v201
        %v290 = vunpack.c.l.b16 %v202
        %v291 = vunpack.c.h.b16 %v202
        %v292 = vunpack.c.l.b16 %v203
        %v293 = vunpack.c.h.b16 %v203
        %v294 = vunpack.c.l.b16 %v204
        %v295 = vunpack.c.h.b16 %v204
        %v296 = vunpack.c.l.b16 %v205
        %v297 = vunpack.c.h.b16 %v205
        %v298 = vpack.c.b16 %v268, %v266
        %v299 = vpack.c.b16 %v269, %v267
        %v300 = vpack.c.b16 %v272, %v270
        %v301 = vpack.c.b16 %v273, %v271
        %v302 = vpack.c.b16 %v276, %v274
        %v303 = vpack.c.b16 %v277, %v275
        %v304 = vpack.c.b16 %v280, %v278
        %v305 = vpack.c.b16 %v281, %v279
        %v306 = vpack.c.b16 %v284, %v282
        %v307 = vpack.c.b16 %v285, %v283
        %v308 = vpack.c.b16 %v288, %v286
        %v309 = vpack.c.b16 %v289, %v287
        %v310 = vpack.c.b16 %v292, %v290
        %v311 = vpack.c.b16 %v293, %v291
        %v312 = vpack.c.b16 %v296, %v294
        %v313 = vpack.c.b16 %v297, %v295
        %v362 = vunpack.c.l.b16 %v206
        %v363 = vunpack.c.h.b16 %v206
        %v364 = vunpack.c.l.b16 %v207
        %v365 = vunpack.c.h.b16 %v207
        %v366 = vunpack.c.l.b16 %v208
        %v367 = vunpack.c.h.b16 %v208
        %v368 = vunpack.c.l.b16 %v209
        %v369 = vunpack.c.h.b16 %v209
        %v370 = vunpack.c.l.b16 %v210
        %v371 = vunpack.c.h.b16 %v210
        %v372 = vunpack.c.l.b16 %v211
        %v373 = vunpack.c.h.b16 %v211
        %v374 = vunpack.c.l.b16 %v212
        %v375 = vunpack.c.h.b16 %v212
        %v376 = vunpack.c.l.b16 %v213
        %v377 = vunpack.c.h.b16 %v213
        %v378 = vunpack.c.l.b16 %v214
        %v379 = vunpack.c.h.b16 %v214
        %v380 = vunpack.c.l.b16 %v215
        %v381 = vunpack.c.h.b16 %v215
        %v382 = vunpack.c.l.b16 %v216
        %v383 = vunpack.c.h.b16 %v216
        %v384 = vunpack.c.l.b16 %v217
        %v385 = vunpack.c.h.b16 %v217
        %v386 = vunpack.c.l.b16 %v218
        %v387 = vunpack.c.h.b16 %v218
        %v388 = vunpack.c.l.b16 %v219
        %v389 = vunpack.c.h.b16 %v219
        %v390 = vunpack.c.l.b16 %v220
        %v391 = vunpack.c.h.b16 %v220
        %v392 = vunpack.c.l.b16 %v221
        %v393 = vunpack.c.h.b16 %v221
        %v394 = vunpack.c.l.b16 %v222
        %v395 = vunpack.c.h.b16 %v222
        %v396 = vunpack.c.l.b16 %v223
        %v397 = vunpack.c.h.b16 %v223
        %v398 = vunpack.c.l.b16 %v224
        %v399 = vunpack.c.h.b16 %v224
        %v400 = vunpack.c.l.b16 %v225
        %v401 = vunpack.c.h.b16 %v225
        %v402 = vunpack.c.l.b16 %v226
        %v403 = vunpack.c.h.b16 %v226
        %v404 = vunpack.c.l.b16 %v227
        %v405 = vunpack.c.h.b16 %v227
        %v406 = vunpack.c.l.b16 %v228
        %v407 = vunpack.c.h.b16 %v228
        %v408 = vunpack.c.l.b16 %v229
        %v409 = vunpack.c.h.b16 %v229
        %v410 = vunpack.c.l.b16 %v230
        %v411 = vunpack.c.h.b16 %v230
        %v412 = vunpack.c.l.b16 %v231
        %v413 = vunpack.c.h.b16 %v231
        %v414 = vunpack.c.l.b16 %v232
        %v415 = vunpack.c.h.b16 %v232
        %v416 = vunpack.c.l.b16 %v233
        %v417 = vunpack.c.h.b16 %v233
        %v418 = vunpack.c.l.b16 %v234
        %v419 = vunpack.c.h.b16 %v234
        %v420 = vunpack.c.l.b16 %v235
        %v421 = vunpack.c.h.b16 %v235
        %v422 = vunpack.c.l.b16 %v236
        %v423 = vunpack.c.h.b16 %v236
        %v424 = vunpack.c.l.b16 %v237
        %v425 = vunpack.c.h.b16 %v237
        %v426 = vpack.c.b16 %v364, %v362
        %v427 = vpack.c.b16 %v365, %v363
        %v428 = vpack.c.b16 %v368, %v366
        %v429 = vpack.c.b16 %v369, %v367
        %v430 = vpack.c.b16 %v372, %v370
        %v431 = vpack.c.b16 %v373, %v371
        %v432 = vpack.c.b16 %v376, %v374
        %v433 = vpack.c.b16 %v377, %v375
        %v434 = vpack.c.b16 %v380, %v378
        %v435 = vpack.c.b16 %v381, %v379
        %v436 = vpack.c.b16 %v384, %v382
        %v437 = vpack.c.b16 %v385, %v383
        %v438 = vpack.c.b16 %v388, %v386
        %v439 = vpack.c.b16 %v389, %v387
        %v440 = vpack.c.b16 %v392, %v390
        %v441 = vpack.c.b16 %v393, %v391
        %v442 = vpack.c.b16 %v396, %v394
        %v443 = vpack.c.b16 %v397, %v395
        %v444 = vpack.c.b16 %v400, %v398
        %v445 = vpack.c.b16 %v401, %v399
        %v446 = vpack.c.b16 %v404, %v402
        %v447 = vpack.c.b16 %v405, %v403
        %v448 = vpack.c.b16 %v408, %v406
        %v449 = vpack.c.b16 %v409, %v407
        %v450 = vpack.c.b16 %v412, %v410
        %v451 = vpack.c.b16 %v413, %v411
        %v452 = vpack.c.b16 %v416, %v414
        %v453 = vpack.c.b16 %v417, %v415
        %v454 = vpack.c.b16 %v420, %v418
        %v455 = vpack.c.b16 %v421, %v419
        %v456 = vpack.c.b16 %v424, %v422
        %v457 = vpack.c.b16 %v425, %v423
        %490 = vmatprep.subr.bf16.mxu0 %v427
        %491 = vmatpush1.bf16.msra.mxu0 %v426
        %492 = vmatprep.subr.bf16.mxu0 %v429
        %493 = vmatpush1.bf16.msra.mxu0 %v428
        %494 = vmatprep.subr.bf16.mxu0 %v431
        %495 = vmatpush1.bf16.msra.mxu0 %v430
        %496 = vmatprep.subr.bf16.mxu0 %v433
        %497 = vmatpush1.bf16.msra.mxu0 %v432
        %498 = vmatprep.subr.bf16.mxu0 %v435
        %499 = vmatpush1.bf16.msra.mxu0 %v434
        %500 = vmatprep.subr.bf16.mxu0 %v437
        %501 = vmatpush1.bf16.msra.mxu0 %v436
        %502 = vmatprep.subr.bf16.mxu0 %v439
        %503 = vmatpush1.bf16.msra.mxu0 %v438
        %504 = vmatprep.subr.bf16.mxu0 %v441
        %505 = vmatpush1.bf16.msra.mxu0 %v440
        %506 = vmatprep.subr.bf16.mxu0 %v443
        %507 = vmatpush1.bf16.msra.mxu0 %v442
        %508 = vmatprep.subr.bf16.mxu0 %v445
        %509 = vmatpush1.bf16.msra.mxu0 %v444
        %510 = vmatprep.subr.bf16.mxu0 %v447
        %511 = vmatpush1.bf16.msra.mxu0 %v446
        %512 = vmatprep.subr.bf16.mxu0 %v449
        %513 = vmatpush1.bf16.msra.mxu0 %v448
        %514 = vmatprep.subr.bf16.mxu0 %v451
        %515 = vmatpush1.bf16.msra.mxu0 %v450
        %516 = vmatprep.subr.bf16.mxu0 %v453
        %517 = vmatpush1.bf16.msra.mxu0 %v452
        %518 = vmatprep.subr.bf16.mxu0 %v455
        %519 = vmatpush1.bf16.msra.mxu0 %v454
        %520 = vmatprep.subr.bf16.mxu0 %v457
        %521 = vmatpush1.bf16.msra.mxu0 %v456
        %522 = vmatprep.mubr.bf16.mxu0 %v299
        %523 = vmatmul.mubr.bf16.gmra.mrb[0].mxu0 %v298
        %v524 = vpop.f32.mrb[0].mxu0
        %v525 = vadd.f32 %v243, %v524
        %v526 = vpop.f32.mrb[0].mxu0
        %v527 = vadd.f32 %v247, %v526
        %v528 = vpop.f32.mrb[0].mxu0
        %v529 = vadd.f32 %v243, %v528
        %v530 = vpop.f32.mrb[0].mxu0
        %v531 = vadd.f32 %v247, %v530
        %532 = vmatprep.mubr.bf16.mxu0 %v301
        %533 = vmatmul.mubr.bf16.gmra.mrb[0].mxu0 %v300
        %v534 = vpop.f32.mrb[0].mxu0
        %v535 = vadd.f32 %v243, %v534
        %v536 = vpop.f32.mrb[0].mxu0
        %v537 = vadd.f32 %v247, %v536
        %v538 = vpop.f32.mrb[0].mxu0
        %v539 = vadd.f32 %v243, %v538
        %v540 = vpop.f32.mrb[0].mxu0
        %v541 = vadd.f32 %v247, %v540
        %542 = vmatprep.mubr.bf16.mxu0 %v303
        %543 = vmatmul.mubr.bf16.gmra.mrb[0].mxu0 %v302
        %v544 = vpop.f32.mrb[0].mxu0
        %v545 = vadd.f32 %v243, %v544
        %v546 = vpop.f32.mrb[0].mxu0
        %v547 = vadd.f32 %v247, %v546
        %v548 = vpop.f32.mrb[0].mxu0
        %v549 = vadd.f32 %v243, %v548
        %v550 = vpop.f32.mrb[0].mxu0
        %v551 = vadd.f32 %v247, %v550
        %552 = vmatprep.mubr.bf16.mxu0 %v305
        %553 = vmatmul.mubr.bf16.gmra.mrb[0].mxu0 %v304
        %v554 = vpop.f32.mrb[0].mxu0
        %v555 = vadd.f32 %v243, %v554
        %v556 = vpop.f32.mrb[0].mxu0
        %v557 = vadd.f32 %v247, %v556
        %v558 = vpop.f32.mrb[0].mxu0
        %v559 = vadd.f32 %v243, %v558
        %v560 = vpop.f32.mrb[0].mxu0
        %v561 = vadd.f32 %v247, %v560
        %562 = vmatprep.mubr.bf16.mxu0 %v307
        %563 = vmatmul.mubr.bf16.gmra.mrb[0].mxu0 %v306
        %v564 = vpop.f32.mrb[0].mxu0
        %v565 = vadd.f32 %v243, %v564
        %v566 = vpop.f32.mrb[0].mxu0
        %v567 = vadd.f32 %v247, %v566
        %v568 = vpop.f32.mrb[0].mxu0
        %v569 = vadd.f32 %v243, %v568
        %v570 = vpop.f32.mrb[0].mxu0
        %v571 = vadd.f32 %v247, %v570
        %572 = vmatprep.mubr.bf16.mxu0 %v309
        %573 = vmatmul.mubr.bf16.gmra.mrb[0].mxu0 %v308
        %v574 = vpop.f32.mrb[0].mxu0
        %v575 = vadd.f32 %v243, %v574
        %v576 = vpop.f32.mrb[0].mxu0
        %v577 = vadd.f32 %v247, %v576
        %v578 = vpop.f32.mrb[0].mxu0
        %v579 = vadd.f32 %v243, %v578
        %v580 = vpop.f32.mrb[0].mxu0
        %v581 = vadd.f32 %v247, %v580
        %582 = vmatprep.mubr.bf16.mxu0 %v311
        %583 = vmatmul.mubr.bf16.gmra.mrb[0].mxu0 %v310
        %v584 = vpop.f32.mrb[0].mxu0
        %v585 = vadd.f32 %v243, %v584
        %v586 = vpop.f32.mrb[0].mxu0
        %v587 = vadd.f32 %v247, %v586
        %v588 = vpop.f32.mrb[0].mxu0
        %v589 = vadd.f32 %v243, %v588
        %v590 = vpop.f32.mrb[0].mxu0
        %v591 = vadd.f32 %v247, %v590
        %592 = vmatprep.mubr.bf16.mxu0 %v313
        %593 = vmatmul.mubr.bf16.gmra.mrb[0].mxu0 %v312
        %v594 = vpop.f32.mrb[0].mxu0
        %v595 = vadd.f32 %v243, %v594
        %v596 = vpop.f32.mrb[0].mxu0
        %v597 = vadd.f32 %v247, %v596
        %v598 = vpop.f32.mrb[0].mxu0
        %v599 = vadd.f32 %v243, %v598
        %v600 = vpop.f32.mrb[0].mxu0
        %v601 = vadd.f32 %v247, %v600
        %602 = vdwg.mxu0
        %v603 = vpack.c.bf16 %v529, %v525
        %v604 = vpack.c.bf16 %v531, %v527
        %v605 = vpack.c.bf16 %v539, %v535
        %v606 = vpack.c.bf16 %v541, %v537
        %v607 = vpack.c.bf16 %v549, %v545
        %v608 = vpack.c.bf16 %v551, %v547
        %v609 = vpack.c.bf16 %v559, %v555
        %v610 = vpack.c.bf16 %v561, %v557
        %v611 = vpack.c.bf16 %v569, %v565
        %v612 = vpack.c.bf16 %v571, %v567
        %v613 = vpack.c.bf16 %v579, %v575
        %v614 = vpack.c.bf16 %v581, %v577
        %v615 = vpack.c.bf16 %v589, %v585
        %v616 = vpack.c.bf16 %v591, %v587
        %v617 = vpack.c.bf16 %v599, %v595
        %v618 = vpack.c.bf16 %v601, %v597
        %s619 = scalar_lea.vmem [#allocation2], 256
        %v620 = vld [vmem:[%s619] sm:$0xff]
        %v621 = vld [vmem:[%s619 + $0x8] sm:$0xff]
        %v622 = vld [vmem:[%s619 + $0x10] sm:$0xff]
        %v623 = vld [vmem:[%s619 + $0x18] sm:$0xff]
        %v624 = vld [vmem:[%s619 + $0x20] sm:$0xff]
        %v625 = vld [vmem:[%s619 + $0x28] sm:$0xff]
        %v626 = vld [vmem:[%s619 + $0x30] sm:$0xff]
        %v627 = vld [vmem:[%s619 + $0x38] sm:$0xff]
        %v628 = vld [vmem:[%s619 + $0x40] sm:$0xff]
        %v629 = vld [vmem:[%s619 + $0x48] sm:$0xff]
        %v630 = vld [vmem:[%s619 + $0x50] sm:$0xff]
        %v631 = vld [vmem:[%s619 + $0x58] sm:$0xff]
        %v632 = vld [vmem:[%s619 + $0x60] sm:$0xff]
        %v633 = vld [vmem:[%s619 + $0x68] sm:$0xff]
        %v634 = vld [vmem:[%s619 + $0x70] sm:$0xff]
        %v635 = vld [vmem:[%s619 + $0x78] sm:$0xff]
        %v636 = vld [vmem:[%s619 + $0x80] sm:$0xff]
        %v637 = vld [vmem:[%s619 + $0x88] sm:$0xff]
        %v638 = vld [vmem:[%s619 + $0x90] sm:$0xff]
        %v639 = vld [vmem:[%s619 + $0x98] sm:$0xff]
        %v640 = vld [vmem:[%s619 + $0xa0] sm:$0xff]
        %v641 = vld [vmem:[%s619 + $0xa8] sm:$0xff]
        %v642 = vld [vmem:[%s619 + $0xb0] sm:$0xff]
        %v643 = vld [vmem:[%s619 + $0xb8] sm:$0xff]
        %v644 = vld [vmem:[%s619 + $0xc0] sm:$0xff]
        %v645 = vld [vmem:[%s619 + $0xc8] sm:$0xff]
        %v646 = vld [vmem:[%s619 + $0xd0] sm:$0xff]
        %v647 = vld [vmem:[%s619 + $0xd8] sm:$0xff]
        %v648 = vld [vmem:[%s619 + $0xe0] sm:$0xff]
        %v649 = vld [vmem:[%s619 + $0xe8] sm:$0xff]
        %v650 = vld [vmem:[%s619 + $0xf0] sm:$0xff]
        %v651 = vld [vmem:[%s619 + $0xf8] sm:$0xff]
        %s652 = scalar_lea.vmem %s2, 2
        %v653 = vld [vmem:[%s652] sm:$0x3]
        %v655 = vlaneseq
        %v656 = vshrl.u32 %v655, 7
        %v657 = vsub.s32 0, %v656
        %v658 = vrot.slane %v653, %v657
        %v659 = vlaneseq
        %v660 = vshrl.u32 %v659, 7
        %v661 = vsub.s32 1, %v660
        %v662 = vrot.slane %v653, %v661
        %v697 = vunpack.c.l.b16 %v620
        %v698 = vunpack.c.h.b16 %v620
        %v699 = vunpack.c.l.b16 %v621
        %v700 = vunpack.c.h.b16 %v621
        %v701 = vunpack.c.l.b16 %v622
        %v702 = vunpack.c.h.b16 %v622
        %v703 = vunpack.c.l.b16 %v623
        %v704 = vunpack.c.h.b16 %v623
        %v705 = vunpack.c.l.b16 %v624
        %v706 = vunpack.c.h.b16 %v624
        %v707 = vunpack.c.l.b16 %v625
        %v708 = vunpack.c.h.b16 %v625
        %v709 = vunpack.c.l.b16 %v626
        %v710 = vunpack.c.h.b16 %v626
        %v711 = vunpack.c.l.b16 %v627
        %v712 = vunpack.c.h.b16 %v627
        %v713 = vunpack.c.l.b16 %v628
        %v714 = vunpack.c.h.b16 %v628
        %v715 = vunpack.c.l.b16 %v629
        %v716 = vunpack.c.h.b16 %v629
        %v717 = vunpack.c.l.b16 %v630
        %v718 = vunpack.c.h.b16 %v630
        %v719 = vunpack.c.l.b16 %v631
        %v720 = vunpack.c.h.b16 %v631
        %v721 = vunpack.c.l.b16 %v632
        %v722 = vunpack.c.h.b16 %v632
        %v723 = vunpack.c.l.b16 %v633
        %v724 = vunpack.c.h.b16 %v633
        %v725 = vunpack.c.l.b16 %v634
        %v726 = vunpack.c.h.b16 %v634
        %v727 = vunpack.c.l.b16 %v635
        %v728 = vunpack.c.h.b16 %v635
        %v729 = vunpack.c.l.b16 %v636
        %v730 = vunpack.c.h.b16 %v636
        %v731 = vunpack.c.l.b16 %v637
        %v732 = vunpack.c.h.b16 %v637
        %v733 = vunpack.c.l.b16 %v638
        %v734 = vunpack.c.h.b16 %v638
        %v735 = vunpack.c.l.b16 %v639
        %v736 = vunpack.c.h.b16 %v639
        %v737 = vunpack.c.l.b16 %v640
        %v738 = vunpack.c.h.b16 %v640
        %v739 = vunpack.c.l.b16 %v641
        %v740 = vunpack.c.h.b16 %v641
        %v741 = vunpack.c.l.b16 %v642
        %v742 = vunpack.c.h.b16 %v642
        %v743 = vunpack.c.l.b16 %v643
        %v744 = vunpack.c.h.b16 %v643
        %v745 = vunpack.c.l.b16 %v644
        %v746 = vunpack.c.h.b16 %v644
        %v747 = vunpack.c.l.b16 %v645
        %v748 = vunpack.c.h.b16 %v645
        %v749 = vunpack.c.l.b16 %v646
        %v750 = vunpack.c.h.b16 %v646
        %v751 = vunpack.c.l.b16 %v647
        %v752 = vunpack.c.h.b16 %v647
        %v753 = vunpack.c.l.b16 %v648
        %v754 = vunpack.c.h.b16 %v648
        %v755 = vunpack.c.l.b16 %v649
        %v756 = vunpack.c.h.b16 %v649
        %v757 = vunpack.c.l.b16 %v650
        %v758 = vunpack.c.h.b16 %v650
        %v759 = vunpack.c.l.b16 %v651
        %v760 = vunpack.c.h.b16 %v651
        %v761 = vpack.c.b16 %v699, %v697
        %v762 = vpack.c.b16 %v700, %v698
        %v763 = vpack.c.b16 %v703, %v701
        %v764 = vpack.c.b16 %v704, %v702
        %v765 = vpack.c.b16 %v707, %v705
        %v766 = vpack.c.b16 %v708, %v706
        %v767 = vpack.c.b16 %v711, %v709
        %v768 = vpack.c.b16 %v712, %v710
        %v769 = vpack.c.b16 %v715, %v713
        %v770 = vpack.c.b16 %v716, %v714
        %v771 = vpack.c.b16 %v719, %v717
        %v772 = vpack.c.b16 %v720, %v718
        %v773 = vpack.c.b16 %v723, %v721
        %v774 = vpack.c.b16 %v724, %v722
        %v775 = vpack.c.b16 %v727, %v725
        %v776 = vpack.c.b16 %v728, %v726
        %v777 = vpack.c.b16 %v731, %v729
        %v778 = vpack.c.b16 %v732, %v730
        %v779 = vpack.c.b16 %v735, %v733
        %v780 = vpack.c.b16 %v736, %v734
        %v781 = vpack.c.b16 %v739, %v737
        %v782 = vpack.c.b16 %v740, %v738
        %v783 = vpack.c.b16 %v743, %v741
        %v784 = vpack.c.b16 %v744, %v742
        %v785 = vpack.c.b16 %v747, %v745
        %v786 = vpack.c.b16 %v748, %v746
        %v787 = vpack.c.b16 %v751, %v749
        %v788 = vpack.c.b16 %v752, %v750
        %v789 = vpack.c.b16 %v755, %v753
        %v790 = vpack.c.b16 %v756, %v754
        %v791 = vpack.c.b16 %v759, %v757
        %v792 = vpack.c.b16 %v760, %v758
        %825 = vmatprep.subr.bf16.mxu0 %v762
        %826 = vmatpush1.bf16.msra.mxu0 %v761
        %827 = vmatprep.subr.bf16.mxu0 %v764
        %828 = vmatpush1.bf16.msra.mxu0 %v763
        %829 = vmatprep.subr.bf16.mxu0 %v766
        %830 = vmatpush1.bf16.msra.mxu0 %v765
        %831 = vmatprep.subr.bf16.mxu0 %v768
        %832 = vmatpush1.bf16.msra.mxu0 %v767
        %833 = vmatprep.subr.bf16.mxu0 %v770
        %834 = vmatpush1.bf16.msra.mxu0 %v769
        %835 = vmatprep.subr.bf16.mxu0 %v772
        %836 = vmatpush1.bf16.msra.mxu0 %v771
        %837 = vmatprep.subr.bf16.mxu0 %v774
        %838 = vmatpush1.bf16.msra.mxu0 %v773
        %839 = vmatprep.subr.bf16.mxu0 %v776
        %840 = vmatpush1.bf16.msra.mxu0 %v775
        %841 = vmatprep.subr.bf16.mxu0 %v778
        %842 = vmatpush1.bf16.msra.mxu0 %v777
        %843 = vmatprep.subr.bf16.mxu0 %v780
        %844 = vmatpush1.bf16.msra.mxu0 %v779
        %845 = vmatprep.subr.bf16.mxu0 %v782
        %846 = vmatpush1.bf16.msra.mxu0 %v781
        %847 = vmatprep.subr.bf16.mxu0 %v784
        %848 = vmatpush1.bf16.msra.mxu0 %v783
        %849 = vmatprep.subr.bf16.mxu0 %v786
        %850 = vmatpush1.bf16.msra.mxu0 %v785
        %851 = vmatprep.subr.bf16.mxu0 %v788
        %852 = vmatpush1.bf16.msra.mxu0 %v787
        %853 = vmatprep.subr.bf16.mxu0 %v790
        %854 = vmatpush1.bf16.msra.mxu0 %v789
        %855 = vmatprep.subr.bf16.mxu0 %v792
        %856 = vmatpush1.bf16.msra.mxu0 %v791
        %857 = vmatprep.mubr.bf16.mxu0 %v604
        %858 = vmatmul.mubr.bf16.gmra.mrb[0].mxu0 %v603
        %v859 = vpop.f32.mrb[0].mxu0
        %v860 = vadd.f32 %v658, %v859
        %v861 = vpop.f32.mrb[0].mxu0
        %v862 = vadd.f32 %v662, %v861
        %v863 = vpop.f32.mrb[0].mxu0
        %v864 = vadd.f32 %v658, %v863
        %v865 = vpop.f32.mrb[0].mxu0
        %v866 = vadd.f32 %v662, %v865
        %867 = vmatprep.mubr.bf16.mxu0 %v606
        %868 = vmatmul.mubr.bf16.gmra.mrb[0].mxu0 %v605
        %v869 = vpop.f32.mrb[0].mxu0
        %v870 = vadd.f32 %v658, %v869
        %v871 = vpop.f32.mrb[0].mxu0
        %v872 = vadd.f32 %v662, %v871
        %v873 = vpop.f32.mrb[0].mxu0
        %v874 = vadd.f32 %v658, %v873
        %v875 = vpop.f32.mrb[0].mxu0
        %v876 = vadd.f32 %v662, %v875
        %877 = vmatprep.mubr.bf16.mxu0 %v608
        %878 = vmatmul.mubr.bf16.gmra.mrb[0].mxu0 %v607
        %v879 = vpop.f32.mrb[0].mxu0
        %v880 = vadd.f32 %v658, %v879
        %v881 = vpop.f32.mrb[0].mxu0
        %v882 = vadd.f32 %v662, %v881
        %v883 = vpop.f32.mrb[0].mxu0
        %v884 = vadd.f32 %v658, %v883
        %v885 = vpop.f32.mrb[0].mxu0
        %v886 = vadd.f32 %v662, %v885
        %887 = vmatprep.mubr.bf16.mxu0 %v610
        %888 = vmatmul.mubr.bf16.gmra.mrb[0].mxu0 %v609
        %v889 = vpop.f32.mrb[0].mxu0
        %v890 = vadd.f32 %v658, %v889
        %v891 = vpop.f32.mrb[0].mxu0
        %v892 = vadd.f32 %v662, %v891
        %v893 = vpop.f32.mrb[0].mxu0
        %v894 = vadd.f32 %v658, %v893
        %v895 = vpop.f32.mrb[0].mxu0
        %v896 = vadd.f32 %v662, %v895
        %897 = vmatprep.mubr.bf16.mxu0 %v612
        %898 = vmatmul.mubr.bf16.gmra.mrb[0].mxu0 %v611
        %v899 = vpop.f32.mrb[0].mxu0
        %v900 = vadd.f32 %v658, %v899
        %v901 = vpop.f32.mrb[0].mxu0
        %v902 = vadd.f32 %v662, %v901
        %v903 = vpop.f32.mrb[0].mxu0
        %v904 = vadd.f32 %v658, %v903
        %v905 = vpop.f32.mrb[0].mxu0
        %v906 = vadd.f32 %v662, %v905
        %907 = vmatprep.mubr.bf16.mxu0 %v614
        %908 = vmatmul.mubr.bf16.gmra.mrb[0].mxu0 %v613
        %v909 = vpop.f32.mrb[0].mxu0
        %v910 = vadd.f32 %v658, %v909
        %v911 = vpop.f32.mrb[0].mxu0
        %v912 = vadd.f32 %v662, %v911
        %v913 = vpop.f32.mrb[0].mxu0
        %v914 = vadd.f32 %v658, %v913
        %v915 = vpop.f32.mrb[0].mxu0
        %v916 = vadd.f32 %v662, %v915
        %917 = vmatprep.mubr.bf16.mxu0 %v616
        %918 = vmatmul.mubr.bf16.gmra.mrb[0].mxu0 %v615
        %v919 = vpop.f32.mrb[0].mxu0
        %v920 = vadd.f32 %v658, %v919
        %v921 = vpop.f32.mrb[0].mxu0
        %v922 = vadd.f32 %v662, %v921
        %v923 = vpop.f32.mrb[0].mxu0
        %v924 = vadd.f32 %v658, %v923
        %v925 = vpop.f32.mrb[0].mxu0
        %v926 = vadd.f32 %v662, %v925
        %927 = vmatprep.mubr.bf16.mxu0 %v618
        %928 = vmatmul.mubr.bf16.gmra.mrb[0].mxu0 %v617
        %v929 = vpop.f32.mrb[0].mxu0
        %v930 = vadd.f32 %v658, %v929
        %v931 = vpop.f32.mrb[0].mxu0
        %v932 = vadd.f32 %v662, %v931
        %v933 = vpop.f32.mrb[0].mxu0
        %v934 = vadd.f32 %v658, %v933
        %v935 = vpop.f32.mrb[0].mxu0
        %v936 = vadd.f32 %v662, %v935
        %937 = vdwg.mxu0
        %v938 = vpack.c.bf16 %v864, %v860
        %v939 = vpack.c.bf16 %v866, %v862
        %v940 = vpack.c.bf16 %v874, %v870
        %v941 = vpack.c.bf16 %v876, %v872
        %v942 = vpack.c.bf16 %v884, %v880
        %v943 = vpack.c.bf16 %v886, %v882
        %v944 = vpack.c.bf16 %v894, %v890
        %v945 = vpack.c.bf16 %v896, %v892
        %v946 = vpack.c.bf16 %v904, %v900
        %v947 = vpack.c.bf16 %v906, %v902
        %v948 = vpack.c.bf16 %v914, %v910
        %v949 = vpack.c.bf16 %v916, %v912
        %v950 = vpack.c.bf16 %v924, %v920
        %v951 = vpack.c.bf16 %v926, %v922
        %v952 = vpack.c.bf16 %v934, %v930
        %v953 = vpack.c.bf16 %v936, %v932
        %s954 = scalar_lea.vmem [#allocation2], 512
        %v955 = vld [vmem:[%s954] sm:$0xff]
        %v956 = vld [vmem:[%s954 + $0x8] sm:$0xff]
        %v957 = vld [vmem:[%s954 + $0x10] sm:$0xff]
        %v958 = vld [vmem:[%s954 + $0x18] sm:$0xff]
        %v959 = vld [vmem:[%s954 + $0x20] sm:$0xff]
        %v960 = vld [vmem:[%s954 + $0x28] sm:$0xff]
        %v961 = vld [vmem:[%s954 + $0x30] sm:$0xff]
        %v962 = vld [vmem:[%s954 + $0x38] sm:$0xff]
        %v963 = vld [vmem:[%s954 + $0x40] sm:$0xff]
        %v964 = vld [vmem:[%s954 + $0x48] sm:$0xff]
        %v965 = vld [vmem:[%s954 + $0x50] sm:$0xff]
        %v966 = vld [vmem:[%s954 + $0x58] sm:$0xff]
        %v967 = vld [vmem:[%s954 + $0x60] sm:$0xff]
        %v968 = vld [vmem:[%s954 + $0x68] sm:$0xff]
        %v969 = vld [vmem:[%s954 + $0x70] sm:$0xff]
        %v970 = vld [vmem:[%s954 + $0x78] sm:$0xff]
        %v971 = vld [vmem:[%s954 + $0x80] sm:$0xff]
        %v972 = vld [vmem:[%s954 + $0x88] sm:$0xff]
        %v973 = vld [vmem:[%s954 + $0x90] sm:$0xff]
        %v974 = vld [vmem:[%s954 + $0x98] sm:$0xff]
        %v975 = vld [vmem:[%s954 + $0xa0] sm:$0xff]
        %v976 = vld [vmem:[%s954 + $0xa8] sm:$0xff]
        %v977 = vld [vmem:[%s954 + $0xb0] sm:$0xff]
        %v978 = vld [vmem:[%s954 + $0xb8] sm:$0xff]
        %v979 = vld [vmem:[%s954 + $0xc0] sm:$0xff]
        %v980 = vld [vmem:[%s954 + $0xc8] sm:$0xff]
        %v981 = vld [vmem:[%s954 + $0xd0] sm:$0xff]
        %v982 = vld [vmem:[%s954 + $0xd8] sm:$0xff]
        %v983 = vld [vmem:[%s954 + $0xe0] sm:$0xff]
        %v984 = vld [vmem:[%s954 + $0xe8] sm:$0xff]
        %v985 = vld [vmem:[%s954 + $0xf0] sm:$0xff]
        %v986 = vld [vmem:[%s954 + $0xf8] sm:$0xff]
        %s987 = scalar_lea.vmem %s2, 4
        %v988 = vld [vmem:[%s987] sm:$0x3]
        %v990 = vlaneseq
        %v991 = vshrl.u32 %v990, 7
        %v992 = vsub.s32 0, %v991
        %v993 = vrot.slane %v988, %v992
        %v994 = vlaneseq
        %v995 = vshrl.u32 %v994, 7
        %v996 = vsub.s32 1, %v995
        %v997 = vrot.slane %v988, %v996
        %v1032 = vunpack.c.l.b16 %v955
        %v1033 = vunpack.c.h.b16 %v955
        %v1034 = vunpack.c.l.b16 %v956
        %v1035 = vunpack.c.h.b16 %v956
        %v1036 = vunpack.c.l.b16 %v957
        %v1037 = vunpack.c.h.b16 %v957
        %v1038 = vunpack.c.l.b16 %v958
        %v1039 = vunpack.c.h.b16 %v958
        %v1040 = vunpack.c.l.b16 %v959
        %v1041 = vunpack.c.h.b16 %v959
        %v1042 = vunpack.c.l.b16 %v960
        %v1043 = vunpack.c.h.b16 %v960
        %v1044 = vunpack.c.l.b16 %v961
        %v1045 = vunpack.c.h.b16 %v961
        %v1046 = vunpack.c.l.b16 %v962
        %v1047 = vunpack.c.h.b16 %v962
        %v1048 = vunpack.c.l.b16 %v963
        %v1049 = vunpack.c.h.b16 %v963
        %v1050 = vunpack.c.l.b16 %v964
        %v1051 = vunpack.c.h.b16 %v964
        %v1052 = vunpack.c.l.b16 %v965
        %v1053 = vunpack.c.h.b16 %v965
        %v1054 = vunpack.c.l.b16 %v966
        %v1055 = vunpack.c.h.b16 %v966
        %v1056 = vunpack.c.l.b16 %v967
        %v1057 = vunpack.c.h.b16 %v967
        %v1058 = vunpack.c.l.b16 %v968
        %v1059 = vunpack.c.h.b16 %v968
        %v1060 = vunpack.c.l.b16 %v969
        %v1061 = vunpack.c.h.b16 %v969
        %v1062 = vunpack.c.l.b16 %v970
        %v1063 = vunpack.c.h.b16 %v970
        %v1064 = vunpack.c.l.b16 %v971
        %v1065 = vunpack.c.h.b16 %v971
        %v1066 = vunpack.c.l.b16 %v972
        %v1067 = vunpack.c.h.b16 %v972
        %v1068 = vunpack.c.l.b16 %v973
        %v1069 = vunpack.c.h.b16 %v973
        %v1070 = vunpack.c.l.b16 %v974
        %v1071 = vunpack.c.h.b16 %v974
        %v1072 = vunpack.c.l.b16 %v975
        %v1073 = vunpack.c.h.b16 %v975
        %v1074 = vunpack.c.l.b16 %v976
        %v1075 = vunpack.c.h.b16 %v976
        %v1076 = vunpack.c.l.b16 %v977
        %v1077 = vunpack.c.h.b16 %v977
        %v1078 = vunpack.c.l.b16 %v978
        %v1079 = vunpack.c.h.b16 %v978
        %v1080 = vunpack.c.l.b16 %v979
        %v1081 = vunpack.c.h.b16 %v979
        %v1082 = vunpack.c.l.b16 %v980
        %v1083 = vunpack.c.h.b16 %v980
        %v1084 = vunpack.c.l.b16 %v981
        %v1085 = vunpack.c.h.b16 %v981
        %v1086 = vunpack.c.l.b16 %v982
        %v1087 = vunpack.c.h.b16 %v982
        %v1088 = vunpack.c.l.b16 %v983
        %v1089 = vunpack.c.h.b16 %v983
        %v1090 = vunpack.c.l.b16 %v984
        %v1091 = vunpack.c.h.b16 %v984
        %v1092 = vunpack.c.l.b16 %v985
        %v1093 = vunpack.c.h.b16 %v985
        %v1094 = vunpack.c.l.b16 %v986
        %v1095 = vunpack.c.h.b16 %v986
        %v1096 = vpack.c.b16 %v1034, %v1032
        %v1097 = vpack.c.b16 %v1035, %v1033
        %v1098 = vpack.c.b16 %v1038, %v1036
        %v1099 = vpack.c.b16 %v1039, %v1037
        %v1100 = vpack.c.b16 %v1042, %v1040
        %v1101 = vpack.c.b16 %v1043, %v1041
        %v1102 = vpack.c.b16 %v1046, %v1044
        %v1103 = vpack.c.b16 %v1047, %v1045
        %v1104 = vpack.c.b16 %v1050, %v1048
        %v1105 = vpack.c.b16 %v1051, %v1049
        %v1106 = vpack.c.b16 %v1054, %v1052
        %v1107 = vpack.c.b16 %v1055, %v1053
        %v1108 = vpack.c.b16 %v1058, %v1056
        %v1109 = vpack.c.b16 %v1059, %v1057
        %v1110 = vpack.c.b16 %v1062, %v1060
        %v1111 = vpack.c.b16 %v1063, %v1061
        %v1112 = vpack.c.b16 %v1066, %v1064
        %v1113 = vpack.c.b16 %v1067, %v1065
        %v1114 = vpack.c.b16 %v1070, %v1068
        %v1115 = vpack.c.b16 %v1071, %v1069
        %v1116 = vpack.c.b16 %v1074, %v1072
        %v1117 = vpack.c.b16 %v1075, %v1073
        %v1118 = vpack.c.b16 %v1078, %v1076
        %v1119 = vpack.c.b16 %v1079, %v1077
        %v1120 = vpack.c.b16 %v1082, %v1080
        %v1121 = vpack.c.b16 %v1083, %v1081
        %v1122 = vpack.c.b16 %v1086, %v1084
        %v1123 = vpack.c.b16 %v1087, %v1085
        %v1124 = vpack.c.b16 %v1090, %v1088
        %v1125 = vpack.c.b16 %v1091, %v1089
        %v1126 = vpack.c.b16 %v1094, %v1092
        %v1127 = vpack.c.b16 %v1095, %v1093
        %1160 = vmatprep.subr.bf16.mxu0 %v1097
        %1161 = vmatpush1.bf16.msra.mxu0 %v1096
        %1162 = vmatprep.subr.bf16.mxu0 %v1099
        %1163 = vmatpush1.bf16.msra.mxu0 %v1098
        %1164 = vmatprep.subr.bf16.mxu0 %v1101
        %1165 = vmatpush1.bf16.msra.mxu0 %v1100
        %1166 = vmatprep.subr.bf16.mxu0 %v1103
        %1167 = vmatpush1.bf16.msra.mxu0 %v1102
        %1168 = vmatprep.subr.bf16.mxu0 %v1105
        %1169 = vmatpush1.bf16.msra.mxu0 %v1104
        %1170 = vmatprep.subr.bf16.mxu0 %v1107
        %1171 = vmatpush1.bf16.msra.mxu0 %v1106
        %1172 = vmatprep.subr.bf16.mxu0 %v1109
        %1173 = vmatpush1.bf16.msra.mxu0 %v1108
        %1174 = vmatprep.subr.bf16.mxu0 %v1111
        %1175 = vmatpush1.bf16.msra.mxu0 %v1110
        %1176 = vmatprep.subr.bf16.mxu0 %v1113
        %1177 = vmatpush1.bf16.msra.mxu0 %v1112
        %1178 = vmatprep.subr.bf16.mxu0 %v1115
        %1179 = vmatpush1.bf16.msra.mxu0 %v1114
        %1180 = vmatprep.subr.bf16.mxu0 %v1117
        %1181 = vmatpush1.bf16.msra.mxu0 %v1116
        %1182 = vmatprep.subr.bf16.mxu0 %v1119
        %1183 = vmatpush1.bf16.msra.mxu0 %v1118
        %1184 = vmatprep.subr.bf16.mxu0 %v1121
        %1185 = vmatpush1.bf16.msra.mxu0 %v1120
        %1186 = vmatprep.subr.bf16.mxu0 %v1123
        %1187 = vmatpush1.bf16.msra.mxu0 %v1122
        %1188 = vmatprep.subr.bf16.mxu0 %v1125
        %1189 = vmatpush1.bf16.msra.mxu0 %v1124
        %1190 = vmatprep.subr.bf16.mxu0 %v1127
        %1191 = vmatpush1.bf16.msra.mxu0 %v1126
        %1192 = vmatprep.mubr.bf16.mxu0 %v939
        %1193 = vmatmul.mubr.bf16.gmra.mrb[0].mxu0 %v938
        %v1194 = vpop.f32.mrb[0].mxu0
        %v1195 = vadd.f32 %v993, %v1194
        %v1196 = vpop.f32.mrb[0].mxu0
        %v1197 = vadd.f32 %v997, %v1196
        %v1198 = vpop.f32.mrb[0].mxu0
        %v1199 = vadd.f32 %v993, %v1198
        %v1200 = vpop.f32.mrb[0].mxu0
        %v1201 = vadd.f32 %v997, %v1200
        %1202 = vmatprep.mubr.bf16.mxu0 %v941
        %1203 = vmatmul.mubr.bf16.gmra.mrb[0].mxu0 %v940
        %v1204 = vpop.f32.mrb[0].mxu0
        %v1205 = vadd.f32 %v993, %v1204
        %v1206 = vpop.f32.mrb[0].mxu0
        %v1207 = vadd.f32 %v997, %v1206
        %v1208 = vpop.f32.mrb[0].mxu0
        %v1209 = vadd.f32 %v993, %v1208
        %v1210 = vpop.f32.mrb[0].mxu0
        %v1211 = vadd.f32 %v997, %v1210
        %1212 = vmatprep.mubr.bf16.mxu0 %v943
        %1213 = vmatmul.mubr.bf16.gmra.mrb[0].mxu0 %v942
        %v1214 = vpop.f32.mrb[0].mxu0
        %v1215 = vadd.f32 %v993, %v1214
        %v1216 = vpop.f32.mrb[0].mxu0
        %v1217 = vadd.f32 %v997, %v1216
        %v1218 = vpop.f32.mrb[0].mxu0
        %v1219 = vadd.f32 %v993, %v1218
        %v1220 = vpop.f32.mrb[0].mxu0
        %v1221 = vadd.f32 %v997, %v1220
        %1222 = vmatprep.mubr.bf16.mxu0 %v945
        %1223 = vmatmul.mubr.bf16.gmra.mrb[0].mxu0 %v944
        %v1224 = vpop.f32.mrb[0].mxu0
        %v1225 = vadd.f32 %v993, %v1224
        %v1226 = vpop.f32.mrb[0].mxu0
        %v1227 = vadd.f32 %v997, %v1226
        %v1228 = vpop.f32.mrb[0].mxu0
        %v1229 = vadd.f32 %v993, %v1228
        %v1230 = vpop.f32.mrb[0].mxu0
        %v1231 = vadd.f32 %v997, %v1230
        %1232 = vmatprep.mubr.bf16.mxu0 %v947
        %1233 = vmatmul.mubr.bf16.gmra.mrb[0].mxu0 %v946
        %v1234 = vpop.f32.mrb[0].mxu0
        %v1235 = vadd.f32 %v993, %v1234
        %v1236 = vpop.f32.mrb[0].mxu0
        %v1237 = vadd.f32 %v997, %v1236
        %v1238 = vpop.f32.mrb[0].mxu0
        %v1239 = vadd.f32 %v993, %v1238
        %v1240 = vpop.f32.mrb[0].mxu0
        %v1241 = vadd.f32 %v997, %v1240
        %1242 = vmatprep.mubr.bf16.mxu0 %v949
        %1243 = vmatmul.mubr.bf16.gmra.mrb[0].mxu0 %v948
        %v1244 = vpop.f32.mrb[0].mxu0
        %v1245 = vadd.f32 %v993, %v1244
        %v1246 = vpop.f32.mrb[0].mxu0
        %v1247 = vadd.f32 %v997, %v1246
        %v1248 = vpop.f32.mrb[0].mxu0
        %v1249 = vadd.f32 %v993, %v1248
        %v1250 = vpop.f32.mrb[0].mxu0
        %v1251 = vadd.f32 %v997, %v1250
        %1252 = vmatprep.mubr.bf16.mxu0 %v951
        %1253 = vmatmul.mubr.bf16.gmra.mrb[0].mxu0 %v950
        %v1254 = vpop.f32.mrb[0].mxu0
        %v1255 = vadd.f32 %v993, %v1254
        %v1256 = vpop.f32.mrb[0].mxu0
        %v1257 = vadd.f32 %v997, %v1256
        %v1258 = vpop.f32.mrb[0].mxu0
        %v1259 = vadd.f32 %v993, %v1258
        %v1260 = vpop.f32.mrb[0].mxu0
        %v1261 = vadd.f32 %v997, %v1260
        %1262 = vmatprep.mubr.bf16.mxu0 %v953
        %1263 = vmatmul.mubr.bf16.gmra.mrb[0].mxu0 %v952
        %v1264 = vpop.f32.mrb[0].mxu0
        %v1265 = vadd.f32 %v993, %v1264
        %v1266 = vpop.f32.mrb[0].mxu0
        %v1267 = vadd.f32 %v997, %v1266
        %v1268 = vpop.f32.mrb[0].mxu0
        %v1269 = vadd.f32 %v993, %v1268
        %v1270 = vpop.f32.mrb[0].mxu0
        %v1271 = vadd.f32 %v997, %v1270
        %1272 = vdwg.mxu0
        %v1273 = vpack.c.bf16 %v1199, %v1195
        %v1274 = vpack.c.bf16 %v1201, %v1197
        %v1275 = vpack.c.bf16 %v1209, %v1205
        %v1276 = vpack.c.bf16 %v1211, %v1207
        %v1277 = vpack.c.bf16 %v1219, %v1215
        %v1278 = vpack.c.bf16 %v1221, %v1217
        %v1279 = vpack.c.bf16 %v1229, %v1225
        %v1280 = vpack.c.bf16 %v1231, %v1227
        %v1281 = vpack.c.bf16 %v1239, %v1235
        %v1282 = vpack.c.bf16 %v1241, %v1237
        %v1283 = vpack.c.bf16 %v1249, %v1245
        %v1284 = vpack.c.bf16 %v1251, %v1247
        %v1285 = vpack.c.bf16 %v1259, %v1255
        %v1286 = vpack.c.bf16 %v1261, %v1257
        %v1287 = vpack.c.bf16 %v1269, %v1265
        %v1288 = vpack.c.bf16 %v1271, %v1267
        %s1289 = scalar_lea.vmem [#allocation2], 768
        %v1290 = vld [vmem:[%s1289] sm:$0xff]
        %v1291 = vld [vmem:[%s1289 + $0x8] sm:$0xff]
        %v1292 = vld [vmem:[%s1289 + $0x10] sm:$0xff]
        %v1293 = vld [vmem:[%s1289 + $0x18] sm:$0xff]
        %v1294 = vld [vmem:[%s1289 + $0x20] sm:$0xff]
        %v1295 = vld [vmem:[%s1289 + $0x28] sm:$0xff]
        %v1296 = vld [vmem:[%s1289 + $0x30] sm:$0xff]
        %v1297 = vld [vmem:[%s1289 + $0x38] sm:$0xff]
        %v1298 = vld [vmem:[%s1289 + $0x40] sm:$0xff]
        %v1299 = vld [vmem:[%s1289 + $0x48] sm:$0xff]
        %v1300 = vld [vmem:[%s1289 + $0x50] sm:$0xff]
        %v1301 = vld [vmem:[%s1289 + $0x58] sm:$0xff]
        %v1302 = vld [vmem:[%s1289 + $0x60] sm:$0xff]
        %v1303 = vld [vmem:[%s1289 + $0x68] sm:$0xff]
        %v1304 = vld [vmem:[%s1289 + $0x70] sm:$0xff]
        %v1305 = vld [vmem:[%s1289 + $0x78] sm:$0xff]
        %v1306 = vld [vmem:[%s1289 + $0x80] sm:$0xff]
        %v1307 = vld [vmem:[%s1289 + $0x88] sm:$0xff]
        %v1308 = vld [vmem:[%s1289 + $0x90] sm:$0xff]
        %v1309 = vld [vmem:[%s1289 + $0x98] sm:$0xff]
        %v1310 = vld [vmem:[%s1289 + $0xa0] sm:$0xff]
        %v1311 = vld [vmem:[%s1289 + $0xa8] sm:$0xff]
        %v1312 = vld [vmem:[%s1289 + $0xb0] sm:$0xff]
        %v1313 = vld [vmem:[%s1289 + $0xb8] sm:$0xff]
        %v1314 = vld [vmem:[%s1289 + $0xc0] sm:$0xff]
        %v1315 = vld [vmem:[%s1289 + $0xc8] sm:$0xff]
        %v1316 = vld [vmem:[%s1289 + $0xd0] sm:$0xff]
        %v1317 = vld [vmem:[%s1289 + $0xd8] sm:$0xff]
        %v1318 = vld [vmem:[%s1289 + $0xe0] sm:$0xff]
        %v1319 = vld [vmem:[%s1289 + $0xe8] sm:$0xff]
        %v1320 = vld [vmem:[%s1289 + $0xf0] sm:$0xff]
        %v1321 = vld [vmem:[%s1289 + $0xf8] sm:$0xff]
        %s1322 = scalar_lea.vmem %s2, 6
        %v1323 = vld [vmem:[%s1322] sm:$0x3]
        %v1325 = vlaneseq
        %v1326 = vshrl.u32 %v1325, 7
        %v1327 = vsub.s32 0, %v1326
        %v1328 = vrot.slane %v1323, %v1327
        %v1329 = vlaneseq
        %v1330 = vshrl.u32 %v1329, 7
        %v1331 = vsub.s32 1, %v1330
        %v1332 = vrot.slane %v1323, %v1331
        %v1367 = vunpack.c.l.b16 %v1290
        %v1368 = vunpack.c.h.b16 %v1290
        %v1369 = vunpack.c.l.b16 %v1291
        %v1370 = vunpack.c.h.b16 %v1291
        %v1371 = vunpack.c.l.b16 %v1292
        %v1372 = vunpack.c.h.b16 %v1292
        %v1373 = vunpack.c.l.b16 %v1293
        %v1374 = vunpack.c.h.b16 %v1293
        %v1375 = vunpack.c.l.b16 %v1294
        %v1376 = vunpack.c.h.b16 %v1294
        %v1377 = vunpack.c.l.b16 %v1295
        %v1378 = vunpack.c.h.b16 %v1295
        %v1379 = vunpack.c.l.b16 %v1296
        %v1380 = vunpack.c.h.b16 %v1296
        %v1381 = vunpack.c.l.b16 %v1297
        %v1382 = vunpack.c.h.b16 %v1297
        %v1383 = vunpack.c.l.b16 %v1298
        %v1384 = vunpack.c.h.b16 %v1298
        %v1385 = vunpack.c.l.b16 %v1299
        %v1386 = vunpack.c.h.b16 %v1299
        %v1387 = vunpack.c.l.b16 %v1300
        %v1388 = vunpack.c.h.b16 %v1300
        %v1389 = vunpack.c.l.b16 %v1301
        %v1390 = vunpack.c.h.b16 %v1301
        %v1391 = vunpack.c.l.b16 %v1302
        %v1392 = vunpack.c.h.b16 %v1302
        %v1393 = vunpack.c.l.b16 %v1303
        %v1394 = vunpack.c.h.b16 %v1303
        %v1395 = vunpack.c.l.b16 %v1304
        %v1396 = vunpack.c.h.b16 %v1304
        %v1397 = vunpack.c.l.b16 %v1305
        %v1398 = vunpack.c.h.b16 %v1305
        %v1399 = vunpack.c.l.b16 %v1306
        %v1400 = vunpack.c.h.b16 %v1306
        %v1401 = vunpack.c.l.b16 %v1307
        %v1402 = vunpack.c.h.b16 %v1307
        %v1403 = vunpack.c.l.b16 %v1308
        %v1404 = vunpack.c.h.b16 %v1308
        %v1405 = vunpack.c.l.b16 %v1309
        %v1406 = vunpack.c.h.b16 %v1309
        %v1407 = vunpack.c.l.b16 %v1310
        %v1408 = vunpack.c.h.b16 %v1310
        %v1409 = vunpack.c.l.b16 %v1311
        %v1410 = vunpack.c.h.b16 %v1311
        %v1411 = vunpack.c.l.b16 %v1312
        %v1412 = vunpack.c.h.b16 %v1312
        %v1413 = vunpack.c.l.b16 %v1313
        %v1414 = vunpack.c.h.b16 %v1313
        %v1415 = vunpack.c.l.b16 %v1314
        %v1416 = vunpack.c.h.b16 %v1314
        %v1417 = vunpack.c.l.b16 %v1315
        %v1418 = vunpack.c.h.b16 %v1315
        %v1419 = vunpack.c.l.b16 %v1316
        %v1420 = vunpack.c.h.b16 %v1316
        %v1421 = vunpack.c.l.b16 %v1317
        %v1422 = vunpack.c.h.b16 %v1317
        %v1423 = vunpack.c.l.b16 %v1318
        %v1424 = vunpack.c.h.b16 %v1318
        %v1425 = vunpack.c.l.b16 %v1319
        %v1426 = vunpack.c.h.b16 %v1319
        %v1427 = vunpack.c.l.b16 %v1320
        %v1428 = vunpack.c.h.b16 %v1320
        %v1429 = vunpack.c.l.b16 %v1321
        %v1430 = vunpack.c.h.b16 %v1321
        %v1431 = vpack.c.b16 %v1369, %v1367
        %v1432 = vpack.c.b16 %v1370, %v1368
        %v1433 = vpack.c.b16 %v1373, %v1371
        %v1434 = vpack.c.b16 %v1374, %v1372
        %v1435 = vpack.c.b16 %v1377, %v1375
        %v1436 = vpack.c.b16 %v1378, %v1376
        %v1437 = vpack.c.b16 %v1381, %v1379
        %v1438 = vpack.c.b16 %v1382, %v1380
        %v1439 = vpack.c.b16 %v1385, %v1383
        %v1440 = vpack.c.b16 %v1386, %v1384
        %v1441 = vpack.c.b16 %v1389, %v1387
        %v1442 = vpack.c.b16 %v1390, %v1388
        %v1443 = vpack.c.b16 %v1393, %v1391
        %v1444 = vpack.c.b16 %v1394, %v1392
        %v1445 = vpack.c.b16 %v1397, %v1395
        %v1446 = vpack.c.b16 %v1398, %v1396
        %v1447 = vpack.c.b16 %v1401, %v1399
        %v1448 = vpack.c.b16 %v1402, %v1400
        %v1449 = vpack.c.b16 %v1405, %v1403
        %v1450 = vpack.c.b16 %v1406, %v1404
        %v1451 = vpack.c.b16 %v1409, %v1407
        %v1452 = vpack.c.b16 %v1410, %v1408
        %v1453 = vpack.c.b16 %v1413, %v1411
        %v1454 = vpack.c.b16 %v1414, %v1412
        %v1455 = vpack.c.b16 %v1417, %v1415
        %v1456 = vpack.c.b16 %v1418, %v1416
        %v1457 = vpack.c.b16 %v1421, %v1419
        %v1458 = vpack.c.b16 %v1422, %v1420
        %v1459 = vpack.c.b16 %v1425, %v1423
        %v1460 = vpack.c.b16 %v1426, %v1424
        %v1461 = vpack.c.b16 %v1429, %v1427
        %v1462 = vpack.c.b16 %v1430, %v1428
        %1495 = vmatprep.subr.bf16.mxu0 %v1432
        %1496 = vmatpush1.bf16.msra.mxu0 %v1431
        %1497 = vmatprep.subr.bf16.mxu0 %v1434
        %1498 = vmatpush1.bf16.msra.mxu0 %v1433
        %1499 = vmatprep.subr.bf16.mxu0 %v1436
        %1500 = vmatpush1.bf16.msra.mxu0 %v1435
        %1501 = vmatprep.subr.bf16.mxu0 %v1438
        %1502 = vmatpush1.bf16.msra.mxu0 %v1437
        %1503 = vmatprep.subr.bf16.mxu0 %v1440
        %1504 = vmatpush1.bf16.msra.mxu0 %v1439
        %1505 = vmatprep.subr.bf16.mxu0 %v1442
        %1506 = vmatpush1.bf16.msra.mxu0 %v1441
        %1507 = vmatprep.subr.bf16.mxu0 %v1444
        %1508 = vmatpush1.bf16.msra.mxu0 %v1443
        %1509 = vmatprep.subr.bf16.mxu0 %v1446
        %1510 = vmatpush1.bf16.msra.mxu0 %v1445
        %1511 = vmatprep.subr.bf16.mxu0 %v1448
        %1512 = vmatpush1.bf16.msra.mxu0 %v1447
        %1513 = vmatprep.subr.bf16.mxu0 %v1450
        %1514 = vmatpush1.bf16.msra.mxu0 %v1449
        %1515 = vmatprep.subr.bf16.mxu0 %v1452
        %1516 = vmatpush1.bf16.msra.mxu0 %v1451
        %1517 = vmatprep.subr.bf16.mxu0 %v1454
        %1518 = vmatpush1.bf16.msra.mxu0 %v1453
        %1519 = vmatprep.subr.bf16.mxu0 %v1456
        %1520 = vmatpush1.bf16.msra.mxu0 %v1455
        %1521 = vmatprep.subr.bf16.mxu0 %v1458
        %1522 = vmatpush1.bf16.msra.mxu0 %v1457
        %1523 = vmatprep.subr.bf16.mxu0 %v1460
        %1524 = vmatpush1.bf16.msra.mxu0 %v1459
        %1525 = vmatprep.subr.bf16.mxu0 %v1462
        %1526 = vmatpush1.bf16.msra.mxu0 %v1461
        %1527 = vmatprep.mubr.bf16.mxu0 %v1274
        %1528 = vmatmul.mubr.bf16.gmra.mrb[0].mxu0 %v1273
        %v1529 = vpop.f32.mrb[0].mxu0
        %v1530 = vadd.f32 %v1328, %v1529
        %v1531 = vpop.f32.mrb[0].mxu0
        %v1532 = vadd.f32 %v1332, %v1531
        %v1533 = vpop.f32.mrb[0].mxu0
        %v1534 = vadd.f32 %v1328, %v1533
        %v1535 = vpop.f32.mrb[0].mxu0
        %v1536 = vadd.f32 %v1332, %v1535
        %1537 = vmatprep.mubr.bf16.mxu0 %v1276
        %1538 = vmatmul.mubr.bf16.gmra.mrb[0].mxu0 %v1275
        %v1539 = vpop.f32.mrb[0].mxu0
        %v1540 = vadd.f32 %v1328, %v1539
        %v1541 = vpop.f32.mrb[0].mxu0
        %v1542 = vadd.f32 %v1332, %v1541
        %v1543 = vpop.f32.mrb[0].mxu0
        %v1544 = vadd.f32 %v1328, %v1543
        %v1545 = vpop.f32.mrb[0].mxu0
        %v1546 = vadd.f32 %v1332, %v1545
        %1547 = vmatprep.mubr.bf16.mxu0 %v1278
        %1548 = vmatmul.mubr.bf16.gmra.mrb[0].mxu0 %v1277
        %v1549 = vpop.f32.mrb[0].mxu0
        %v1550 = vadd.f32 %v1328, %v1549
        %v1551 = vpop.f32.mrb[0].mxu0
        %v1552 = vadd.f32 %v1332, %v1551
        %v1553 = vpop.f32.mrb[0].mxu0
        %v1554 = vadd.f32 %v1328, %v1553
        %v1555 = vpop.f32.mrb[0].mxu0
        %v1556 = vadd.f32 %v1332, %v1555
        %1557 = vmatprep.mubr.bf16.mxu0 %v1280
        %1558 = vmatmul.mubr.bf16.gmra.mrb[0].mxu0 %v1279
        %v1559 = vpop.f32.mrb[0].mxu0
        %v1560 = vadd.f32 %v1328, %v1559
        %v1561 = vpop.f32.mrb[0].mxu0
        %v1562 = vadd.f32 %v1332, %v1561
        %v1563 = vpop.f32.mrb[0].mxu0
        %v1564 = vadd.f32 %v1328, %v1563
        %v1565 = vpop.f32.mrb[0].mxu0
        %v1566 = vadd.f32 %v1332, %v1565
        %1567 = vmatprep.mubr.bf16.mxu0 %v1282
        %1568 = vmatmul.mubr.bf16.gmra.mrb[0].mxu0 %v1281
        %v1569 = vpop.f32.mrb[0].mxu0
        %v1570 = vadd.f32 %v1328, %v1569
        %v1571 = vpop.f32.mrb[0].mxu0
        %v1572 = vadd.f32 %v1332, %v1571
        %v1573 = vpop.f32.mrb[0].mxu0
        %v1574 = vadd.f32 %v1328, %v1573
        %v1575 = vpop.f32.mrb[0].mxu0
        %v1576 = vadd.f32 %v1332, %v1575
        %1577 = vmatprep.mubr.bf16.mxu0 %v1284
        %1578 = vmatmul.mubr.bf16.gmra.mrb[0].mxu0 %v1283
        %v1579 = vpop.f32.mrb[0].mxu0
        %v1580 = vadd.f32 %v1328, %v1579
        %v1581 = vpop.f32.mrb[0].mxu0
        %v1582 = vadd.f32 %v1332, %v1581
        %v1583 = vpop.f32.mrb[0].mxu0
        %v1584 = vadd.f32 %v1328, %v1583
        %v1585 = vpop.f32.mrb[0].mxu0
        %v1586 = vadd.f32 %v1332, %v1585
        %1587 = vmatprep.mubr.bf16.mxu0 %v1286
        %1588 = vmatmul.mubr.bf16.gmra.mrb[0].mxu0 %v1285
        %v1589 = vpop.f32.mrb[0].mxu0
        %v1590 = vadd.f32 %v1328, %v1589
        %v1591 = vpop.f32.mrb[0].mxu0
        %v1592 = vadd.f32 %v1332, %v1591
        %v1593 = vpop.f32.mrb[0].mxu0
        %v1594 = vadd.f32 %v1328, %v1593
        %v1595 = vpop.f32.mrb[0].mxu0
        %v1596 = vadd.f32 %v1332, %v1595
        %1597 = vmatprep.mubr.bf16.mxu0 %v1288
        %1598 = vmatmul.mubr.bf16.gmra.mrb[0].mxu0 %v1287
        %v1599 = vpop.f32.mrb[0].mxu0
        %v1600 = vadd.f32 %v1328, %v1599
        %v1601 = vpop.f32.mrb[0].mxu0
        %v1602 = vadd.f32 %v1332, %v1601
        %v1603 = vpop.f32.mrb[0].mxu0
        %v1604 = vadd.f32 %v1328, %v1603
        %v1605 = vpop.f32.mrb[0].mxu0
        %v1606 = vadd.f32 %v1332, %v1605
        %1607 = vdwg.mxu0
        %v1608 = vpack.c.bf16 %v1534, %v1530
        %v1609 = vpack.c.bf16 %v1536, %v1532
        %v1610 = vpack.c.bf16 %v1544, %v1540
        %v1611 = vpack.c.bf16 %v1546, %v1542
        %v1612 = vpack.c.bf16 %v1554, %v1550
        %v1613 = vpack.c.bf16 %v1556, %v1552
        %v1614 = vpack.c.bf16 %v1564, %v1560
        %v1615 = vpack.c.bf16 %v1566, %v1562
        %v1616 = vpack.c.bf16 %v1574, %v1570
        %v1617 = vpack.c.bf16 %v1576, %v1572
        %v1618 = vpack.c.bf16 %v1584, %v1580
        %v1619 = vpack.c.bf16 %v1586, %v1582
        %v1620 = vpack.c.bf16 %v1594, %v1590
        %v1621 = vpack.c.bf16 %v1596, %v1592
        %v1622 = vpack.c.bf16 %v1604, %v1600
        %v1623 = vpack.c.bf16 %v1606, %v1602
        %s1624 = scalar_lea.vmem [#allocation2], 1024
        %v1625 = vld [vmem:[%s1624] sm:$0xff]
        %v1626 = vld [vmem:[%s1624 + $0x8] sm:$0xff]
        %v1627 = vld [vmem:[%s1624 + $0x10] sm:$0xff]
        %v1628 = vld [vmem:[%s1624 + $0x18] sm:$0xff]
        %v1629 = vld [vmem:[%s1624 + $0x20] sm:$0xff]
        %v1630 = vld [vmem:[%s1624 + $0x28] sm:$0xff]
        %v1631 = vld [vmem:[%s1624 + $0x30] sm:$0xff]
        %v1632 = vld [vmem:[%s1624 + $0x38] sm:$0xff]
        %v1633 = vld [vmem:[%s1624 + $0x40] sm:$0xff]
        %v1634 = vld [vmem:[%s1624 + $0x48] sm:$0xff]
        %v1635 = vld [vmem:[%s1624 + $0x50] sm:$0xff]
        %v1636 = vld [vmem:[%s1624 + $0x58] sm:$0xff]
        %v1637 = vld [vmem:[%s1624 + $0x60] sm:$0xff]
        %v1638 = vld [vmem:[%s1624 + $0x68] sm:$0xff]
        %v1639 = vld [vmem:[%s1624 + $0x70] sm:$0xff]
        %v1640 = vld [vmem:[%s1624 + $0x78] sm:$0xff]
        %v1641 = vld [vmem:[%s1624 + $0x80] sm:$0xff]
        %v1642 = vld [vmem:[%s1624 + $0x88] sm:$0xff]
        %v1643 = vld [vmem:[%s1624 + $0x90] sm:$0xff]
        %v1644 = vld [vmem:[%s1624 + $0x98] sm:$0xff]
        %v1645 = vld [vmem:[%s1624 + $0xa0] sm:$0xff]
        %v1646 = vld [vmem:[%s1624 + $0xa8] sm:$0xff]
        %v1647 = vld [vmem:[%s1624 + $0xb0] sm:$0xff]
        %v1648 = vld [vmem:[%s1624 + $0xb8] sm:$0xff]
        %v1649 = vld [vmem:[%s1624 + $0xc0] sm:$0xff]
        %v1650 = vld [vmem:[%s1624 + $0xc8] sm:$0xff]
        %v1651 = vld [vmem:[%s1624 + $0xd0] sm:$0xff]
        %v1652 = vld [vmem:[%s1624 + $0xd8] sm:$0xff]
        %v1653 = vld [vmem:[%s1624 + $0xe0] sm:$0xff]
        %v1654 = vld [vmem:[%s1624 + $0xe8] sm:$0xff]
        %v1655 = vld [vmem:[%s1624 + $0xf0] sm:$0xff]
        %v1656 = vld [vmem:[%s1624 + $0xf8] sm:$0xff]
        %s1657 = scalar_lea.vmem %s2, 8
        %v1658 = vld [vmem:[%s1657] sm:$0x3]
        %v1660 = vlaneseq
        %v1661 = vshrl.u32 %v1660, 7
        %v1662 = vsub.s32 0, %v1661
        %v1663 = vrot.slane %v1658, %v1662
        %v1664 = vlaneseq
        %v1665 = vshrl.u32 %v1664, 7
        %v1666 = vsub.s32 1, %v1665
        %v1667 = vrot.slane %v1658, %v1666
        %v1702 = vunpack.c.l.b16 %v1625
        %v1703 = vunpack.c.h.b16 %v1625
        %v1704 = vunpack.c.l.b16 %v1626
        %v1705 = vunpack.c.h.b16 %v1626
        %v1706 = vunpack.c.l.b16 %v1627
        %v1707 = vunpack.c.h.b16 %v1627
        %v1708 = vunpack.c.l.b16 %v1628
        %v1709 = vunpack.c.h.b16 %v1628
        %v1710 = vunpack.c.l.b16 %v1629
        %v1711 = vunpack.c.h.b16 %v1629
        %v1712 = vunpack.c.l.b16 %v1630
        %v1713 = vunpack.c.h.b16 %v1630
        %v1714 = vunpack.c.l.b16 %v1631
        %v1715 = vunpack.c.h.b16 %v1631
        %v1716 = vunpack.c.l.b16 %v1632
        %v1717 = vunpack.c.h.b16 %v1632
        %v1718 = vunpack.c.l.b16 %v1633
        %v1719 = vunpack.c.h.b16 %v1633
        %v1720 = vunpack.c.l.b16 %v1634
        %v1721 = vunpack.c.h.b16 %v1634
        %v1722 = vunpack.c.l.b16 %v1635
        %v1723 = vunpack.c.h.b16 %v1635
        %v1724 = vunpack.c.l.b16 %v1636
        %v1725 = vunpack.c.h.b16 %v1636
        %v1726 = vunpack.c.l.b16 %v1637
        %v1727 = vunpack.c.h.b16 %v1637
        %v1728 = vunpack.c.l.b16 %v1638
        %v1729 = vunpack.c.h.b16 %v1638
        %v1730 = vunpack.c.l.b16 %v1639
        %v1731 = vunpack.c.h.b16 %v1639
        %v1732 = vunpack.c.l.b16 %v1640
        %v1733 = vunpack.c.h.b16 %v1640
        %v1734 = vunpack.c.l.b16 %v1641
        %v1735 = vunpack.c.h.b16 %v1641
        %v1736 = vunpack.c.l.b16 %v1642
        %v1737 = vunpack.c.h.b16 %v1642
        %v1738 = vunpack.c.l.b16 %v1643
        %v1739 = vunpack.c.h.b16 %v1643
        %v1740 = vunpack.c.l.b16 %v1644
        %v1741 = vunpack.c.h.b16 %v1644
        %v1742 = vunpack.c.l.b16 %v1645
        %v1743 = vunpack.c.h.b16 %v1645
        %v1744 = vunpack.c.l.b16 %v1646
        %v1745 = vunpack.c.h.b16 %v1646
        %v1746 = vunpack.c.l.b16 %v1647
        %v1747 = vunpack.c.h.b16 %v1647
        %v1748 = vunpack.c.l.b16 %v1648
        %v1749 = vunpack.c.h.b16 %v1648
        %v1750 = vunpack.c.l.b16 %v1649
        %v1751 = vunpack.c.h.b16 %v1649
        %v1752 = vunpack.c.l.b16 %v1650
        %v1753 = vunpack.c.h.b16 %v1650
        %v1754 = vunpack.c.l.b16 %v1651
        %v1755 = vunpack.c.h.b16 %v1651
        %v1756 = vunpack.c.l.b16 %v1652
        %v1757 = vunpack.c.h.b16 %v1652
        %v1758 = vunpack.c.l.b16 %v1653
        %v1759 = vunpack.c.h.b16 %v1653
        %v1760 = vunpack.c.l.b16 %v1654
        %v1761 = vunpack.c.h.b16 %v1654
        %v1762 = vunpack.c.l.b16 %v1655
        %v1763 = vunpack.c.h.b16 %v1655
        %v1764 = vunpack.c.l.b16 %v1656
        %v1765 = vunpack.c.h.b16 %v1656
        %v1766 = vpack.c.b16 %v1704, %v1702
        %v1767 = vpack.c.b16 %v1705, %v1703
        %v1768 = vpack.c.b16 %v1708, %v1706
        %v1769 = vpack.c.b16 %v1709, %v1707
        %v1770 = vpack.c.b16 %v1712, %v1710
        %v1771 = vpack.c.b16 %v1713, %v1711
        %v1772 = vpack.c.b16 %v1716, %v1714
        %v1773 = vpack.c.b16 %v1717, %v1715
        %v1774 = vpack.c.b16 %v1720, %v1718
        %v1775 = vpack.c.b16 %v1721, %v1719
        %v1776 = vpack.c.b16 %v1724, %v1722
        %v1777 = vpack.c.b16 %v1725, %v1723
        %v1778 = vpack.c.b16 %v1728, %v1726
        %v1779 = vpack.c.b16 %v1729, %v1727
        %v1780 = vpack.c.b16 %v1732, %v1730
        %v1781 = vpack.c.b16 %v1733, %v1731
        %v1782 = vpack.c.b16 %v1736, %v1734
        %v1783 = vpack.c.b16 %v1737, %v1735
        %v1784 = vpack.c.b16 %v1740, %v1738
        %v1785 = vpack.c.b16 %v1741, %v1739
        %v1786 = vpack.c.b16 %v1744, %v1742
        %v1787 = vpack.c.b16 %v1745, %v1743
        %v1788 = vpack.c.b16 %v1748, %v1746
        %v1789 = vpack.c.b16 %v1749, %v1747
        %v1790 = vpack.c.b16 %v1752, %v1750
        %v1791 = vpack.c.b16 %v1753, %v1751
        %v1792 = vpack.c.b16 %v1756, %v1754
        %v1793 = vpack.c.b16 %v1757, %v1755
        %v1794 = vpack.c.b16 %v1760, %v1758
        %v1795 = vpack.c.b16 %v1761, %v1759
        %v1796 = vpack.c.b16 %v1764, %v1762
        %v1797 = vpack.c.b16 %v1765, %v1763
        %1830 = vmatprep.subr.bf16.mxu0 %v1767
        %1831 = vmatpush1.bf16.msra.mxu0 %v1766
        %1832 = vmatprep.subr.bf16.mxu0 %v1769
        %1833 = vmatpush1.bf16.msra.mxu0 %v1768
        %1834 = vmatprep.subr.bf16.mxu0 %v1771
        %1835 = vmatpush1.bf16.msra.mxu0 %v1770
        %1836 = vmatprep.subr.bf16.mxu0 %v1773
        %1837 = vmatpush1.bf16.msra.mxu0 %v1772
        %1838 = vmatprep.subr.bf16.mxu0 %v1775
        %1839 = vmatpush1.bf16.msra.mxu0 %v1774
        %1840 = vmatprep.subr.bf16.mxu0 %v1777
        %1841 = vmatpush1.bf16.msra.mxu0 %v1776
        %1842 = vmatprep.subr.bf16.mxu0 %v1779
        %1843 = vmatpush1.bf16.msra.mxu0 %v1778
        %1844 = vmatprep.subr.bf16.mxu0 %v1781
        %1845 = vmatpush1.bf16.msra.mxu0 %v1780
        %1846 = vmatprep.subr.bf16.mxu0 %v1783
        %1847 = vmatpush1.bf16.msra.mxu0 %v1782
        %1848 = vmatprep.subr.bf16.mxu0 %v1785
        %1849 = vmatpush1.bf16.msra.mxu0 %v1784
        %1850 = vmatprep.subr.bf16.mxu0 %v1787
        %1851 = vmatpush1.bf16.msra.mxu0 %v1786
        %1852 = vmatprep.subr.bf16.mxu0 %v1789
        %1853 = vmatpush1.bf16.msra.mxu0 %v1788
        %1854 = vmatprep.subr.bf16.mxu0 %v1791
        %1855 = vmatpush1.bf16.msra.mxu0 %v1790
        %1856 = vmatprep.subr.bf16.mxu0 %v1793
        %1857 = vmatpush1.bf16.msra.mxu0 %v1792
        %1858 = vmatprep.subr.bf16.mxu0 %v1795
        %1859 = vmatpush1.bf16.msra.mxu0 %v1794
        %1860 = vmatprep.subr.bf16.mxu0 %v1797
        %1861 = vmatpush1.bf16.msra.mxu0 %v1796
        %1862 = vmatprep.mubr.bf16.mxu0 %v1609
        %1863 = vmatmul.mubr.bf16.gmra.mrb[0].mxu0 %v1608
        %v1864 = vpop.f32.mrb[0].mxu0
        %v1865 = vadd.f32 %v1663, %v1864
        %v1866 = vpop.f32.mrb[0].mxu0
        %v1867 = vadd.f32 %v1667, %v1866
        %v1868 = vpop.f32.mrb[0].mxu0
        %v1869 = vadd.f32 %v1663, %v1868
        %v1870 = vpop.f32.mrb[0].mxu0
        %v1871 = vadd.f32 %v1667, %v1870
        %1872 = vmatprep.mubr.bf16.mxu0 %v1611
        %1873 = vmatmul.mubr.bf16.gmra.mrb[0].mxu0 %v1610
        %v1874 = vpop.f32.mrb[0].mxu0
        %v1875 = vadd.f32 %v1663, %v1874
        %v1876 = vpop.f32.mrb[0].mxu0
        %v1877 = vadd.f32 %v1667, %v1876
        %v1878 = vpop.f32.mrb[0].mxu0
        %v1879 = vadd.f32 %v1663, %v1878
        %v1880 = vpop.f32.mrb[0].mxu0
        %v1881 = vadd.f32 %v1667, %v1880
        %1882 = vmatprep.mubr.bf16.mxu0 %v1613
        %1883 = vmatmul.mubr.bf16.gmra.mrb[0].mxu0 %v1612
        %v1884 = vpop.f32.mrb[0].mxu0
        %v1885 = vadd.f32 %v1663, %v1884
        %v1886 = vpop.f32.mrb[0].mxu0
        %v1887 = vadd.f32 %v1667, %v1886
        %v1888 = vpop.f32.mrb[0].mxu0
        %v1889 = vadd.f32 %v1663, %v1888
        %v1890 = vpop.f32.mrb[0].mxu0
        %v1891 = vadd.f32 %v1667, %v1890
        %1892 = vmatprep.mubr.bf16.mxu0 %v1615
        %1893 = vmatmul.mubr.bf16.gmra.mrb[0].mxu0 %v1614
        %v1894 = vpop.f32.mrb[0].mxu0
        %v1895 = vadd.f32 %v1663, %v1894
        %v1896 = vpop.f32.mrb[0].mxu0
        %v1897 = vadd.f32 %v1667, %v1896
        %v1898 = vpop.f32.mrb[0].mxu0
        %v1899 = vadd.f32 %v1663, %v1898
        %v1900 = vpop.f32.mrb[0].mxu0
        %v1901 = vadd.f32 %v1667, %v1900
        %1902 = vmatprep.mubr.bf16.mxu0 %v1617
        %1903 = vmatmul.mubr.bf16.gmra.mrb[0].mxu0 %v1616
        %v1904 = vpop.f32.mrb[0].mxu0
        %v1905 = vadd.f32 %v1663, %v1904
        %v1906 = vpop.f32.mrb[0].mxu0
        %v1907 = vadd.f32 %v1667, %v1906
        %v1908 = vpop.f32.mrb[0].mxu0
        %v1909 = vadd.f32 %v1663, %v1908
        %v1910 = vpop.f32.mrb[0].mxu0
        %v1911 = vadd.f32 %v1667, %v1910
        %1912 = vmatprep.mubr.bf16.mxu0 %v1619
        %1913 = vmatmul.mubr.bf16.gmra.mrb[0].mxu0 %v1618
        %v1914 = vpop.f32.mrb[0].mxu0
        %v1915 = vadd.f32 %v1663, %v1914
        %v1916 = vpop.f32.mrb[0].mxu0
        %v1917 = vadd.f32 %v1667, %v1916
        %v1918 = vpop.f32.mrb[0].mxu0
        %v1919 = vadd.f32 %v1663, %v1918
        %v1920 = vpop.f32.mrb[0].mxu0
        %v1921 = vadd.f32 %v1667, %v1920
        %1922 = vmatprep.mubr.bf16.mxu0 %v1621
        %1923 = vmatmul.mubr.bf16.gmra.mrb[0].mxu0 %v1620
        %v1924 = vpop.f32.mrb[0].mxu0
        %v1925 = vadd.f32 %v1663, %v1924
        %v1926 = vpop.f32.mrb[0].mxu0
        %v1927 = vadd.f32 %v1667, %v1926
        %v1928 = vpop.f32.mrb[0].mxu0
        %v1929 = vadd.f32 %v1663, %v1928
        %v1930 = vpop.f32.mrb[0].mxu0
        %v1931 = vadd.f32 %v1667, %v1930
        %1932 = vmatprep.mubr.bf16.mxu0 %v1623
        %1933 = vmatmul.mubr.bf16.gmra.mrb[0].mxu0 %v1622
        %v1934 = vpop.f32.mrb[0].mxu0
        %v1935 = vadd.f32 %v1663, %v1934
        %v1936 = vpop.f32.mrb[0].mxu0
        %v1937 = vadd.f32 %v1667, %v1936
        %v1938 = vpop.f32.mrb[0].mxu0
        %v1939 = vadd.f32 %v1663, %v1938
        %v1940 = vpop.f32.mrb[0].mxu0
        %v1941 = vadd.f32 %v1667, %v1940
        %1942 = vdwg.mxu0
        %v1943 = vpack.c.bf16 %v1869, %v1865
        %v1944 = vpack.c.bf16 %v1871, %v1867
        %v1945 = vpack.c.bf16 %v1879, %v1875
        %v1946 = vpack.c.bf16 %v1881, %v1877
        %v1947 = vpack.c.bf16 %v1889, %v1885
        %v1948 = vpack.c.bf16 %v1891, %v1887
        %v1949 = vpack.c.bf16 %v1899, %v1895
        %v1950 = vpack.c.bf16 %v1901, %v1897
        %v1951 = vpack.c.bf16 %v1909, %v1905
        %v1952 = vpack.c.bf16 %v1911, %v1907
        %v1953 = vpack.c.bf16 %v1919, %v1915
        %v1954 = vpack.c.bf16 %v1921, %v1917
        %v1955 = vpack.c.bf16 %v1929, %v1925
        %v1956 = vpack.c.bf16 %v1931, %v1927
        %v1957 = vpack.c.bf16 %v1939, %v1935
        %v1958 = vpack.c.bf16 %v1941, %v1937
        %s1959 = scalar_lea.vmem [#allocation2], 1280
        %v1960 = vld [vmem:[%s1959] sm:$0xff]
        %v1961 = vld [vmem:[%s1959 + $0x8] sm:$0xff]
        %v1962 = vld [vmem:[%s1959 + $0x10] sm:$0xff]
        %v1963 = vld [vmem:[%s1959 + $0x18] sm:$0xff]
        %v1964 = vld [vmem:[%s1959 + $0x20] sm:$0xff]
        %v1965 = vld [vmem:[%s1959 + $0x28] sm:$0xff]
        %v1966 = vld [vmem:[%s1959 + $0x30] sm:$0xff]
        %v1967 = vld [vmem:[%s1959 + $0x38] sm:$0xff]
        %v1968 = vld [vmem:[%s1959 + $0x40] sm:$0xff]
        %v1969 = vld [vmem:[%s1959 + $0x48] sm:$0xff]
        %v1970 = vld [vmem:[%s1959 + $0x50] sm:$0xff]
        %v1971 = vld [vmem:[%s1959 + $0x58] sm:$0xff]
        %v1972 = vld [vmem:[%s1959 + $0x60] sm:$0xff]
        %v1973 = vld [vmem:[%s1959 + $0x68] sm:$0xff]
        %v1974 = vld [vmem:[%s1959 + $0x70] sm:$0xff]
        %v1975 = vld [vmem:[%s1959 + $0x78] sm:$0xff]
        %v1976 = vld [vmem:[%s1959 + $0x80] sm:$0xff]
        %v1977 = vld [vmem:[%s1959 + $0x88] sm:$0xff]
        %v1978 = vld [vmem:[%s1959 + $0x90] sm:$0xff]
        %v1979 = vld [vmem:[%s1959 + $0x98] sm:$0xff]
        %v1980 = vld [vmem:[%s1959 + $0xa0] sm:$0xff]
        %v1981 = vld [vmem:[%s1959 + $0xa8] sm:$0xff]
        %v1982 = vld [vmem:[%s1959 + $0xb0] sm:$0xff]
        %v1983 = vld [vmem:[%s1959 + $0xb8] sm:$0xff]
        %v1984 = vld [vmem:[%s1959 + $0xc0] sm:$0xff]
        %v1985 = vld [vmem:[%s1959 + $0xc8] sm:$0xff]
        %v1986 = vld [vmem:[%s1959 + $0xd0] sm:$0xff]
        %v1987 = vld [vmem:[%s1959 + $0xd8] sm:$0xff]
        %v1988 = vld [vmem:[%s1959 + $0xe0] sm:$0xff]
        %v1989 = vld [vmem:[%s1959 + $0xe8] sm:$0xff]
        %v1990 = vld [vmem:[%s1959 + $0xf0] sm:$0xff]
        %v1991 = vld [vmem:[%s1959 + $0xf8] sm:$0xff]
        %s1992 = scalar_lea.vmem %s2, 10
        %v1993 = vld [vmem:[%s1992] sm:$0x3]
        %v1995 = vlaneseq
        %v1996 = vshrl.u32 %v1995, 7
        %v1997 = vsub.s32 0, %v1996
        %v1998 = vrot.slane %v1993, %v1997
        %v1999 = vlaneseq
        %v2000 = vshrl.u32 %v1999, 7
        %v2001 = vsub.s32 1, %v2000
        %v2002 = vrot.slane %v1993, %v2001
        %v2037 = vunpack.c.l.b16 %v1960
        %v2038 = vunpack.c.h.b16 %v1960
        %v2039 = vunpack.c.l.b16 %v1961
        %v2040 = vunpack.c.h.b16 %v1961
        %v2041 = vunpack.c.l.b16 %v1962
        %v2042 = vunpack.c.h.b16 %v1962
        %v2043 = vunpack.c.l.b16 %v1963
        %v2044 = vunpack.c.h.b16 %v1963
        %v2045 = vunpack.c.l.b16 %v1964
        %v2046 = vunpack.c.h.b16 %v1964
        %v2047 = vunpack.c.l.b16 %v1965
        %v2048 = vunpack.c.h.b16 %v1965
        %v2049 = vunpack.c.l.b16 %v1966
        %v2050 = vunpack.c.h.b16 %v1966
        %v2051 = vunpack.c.l.b16 %v1967
        %v2052 = vunpack.c.h.b16 %v1967
        %v2053 = vunpack.c.l.b16 %v1968
        %v2054 = vunpack.c.h.b16 %v1968
        %v2055 = vunpack.c.l.b16 %v1969
        %v2056 = vunpack.c.h.b16 %v1969
        %v2057 = vunpack.c.l.b16 %v1970
        %v2058 = vunpack.c.h.b16 %v1970
        %v2059 = vunpack.c.l.b16 %v1971
        %v2060 = vunpack.c.h.b16 %v1971
        %v2061 = vunpack.c.l.b16 %v1972
        %v2062 = vunpack.c.h.b16 %v1972
        %v2063 = vunpack.c.l.b16 %v1973
        %v2064 = vunpack.c.h.b16 %v1973
        %v2065 = vunpack.c.l.b16 %v1974
        %v2066 = vunpack.c.h.b16 %v1974
        %v2067 = vunpack.c.l.b16 %v1975
        %v2068 = vunpack.c.h.b16 %v1975
        %v2069 = vunpack.c.l.b16 %v1976
        %v2070 = vunpack.c.h.b16 %v1976
        %v2071 = vunpack.c.l.b16 %v1977
        %v2072 = vunpack.c.h.b16 %v1977
        %v2073 = vunpack.c.l.b16 %v1978
        %v2074 = vunpack.c.h.b16 %v1978
        %v2075 = vunpack.c.l.b16 %v1979
        %v2076 = vunpack.c.h.b16 %v1979
        %v2077 = vunpack.c.l.b16 %v1980
        %v2078 = vunpack.c.h.b16 %v1980
        %v2079 = vunpack.c.l.b16 %v1981
        %v2080 = vunpack.c.h.b16 %v1981
        %v2081 = vunpack.c.l.b16 %v1982
        %v2082 = vunpack.c.h.b16 %v1982
        %v2083 = vunpack.c.l.b16 %v1983
        %v2084 = vunpack.c.h.b16 %v1983
        %v2085 = vunpack.c.l.b16 %v1984
        %v2086 = vunpack.c.h.b16 %v1984
        %v2087 = vunpack.c.l.b16 %v1985
        %v2088 = vunpack.c.h.b16 %v1985
        %v2089 = vunpack.c.l.b16 %v1986
        %v2090 = vunpack.c.h.b16 %v1986
        %v2091 = vunpack.c.l.b16 %v1987
        %v2092 = vunpack.c.h.b16 %v1987
        %v2093 = vunpack.c.l.b16 %v1988
        %v2094 = vunpack.c.h.b16 %v1988
        %v2095 = vunpack.c.l.b16 %v1989
        %v2096 = vunpack.c.h.b16 %v1989
        %v2097 = vunpack.c.l.b16 %v1990
        %v2098 = vunpack.c.h.b16 %v1990
        %v2099 = vunpack.c.l.b16 %v1991
        %v2100 = vunpack.c.h.b16 %v1991
        %v2101 = vpack.c.b16 %v2039, %v2037
        %v2102 = vpack.c.b16 %v2040, %v2038
        %v2103 = vpack.c.b16 %v2043, %v2041
        %v2104 = vpack.c.b16 %v2044, %v2042
        %v2105 = vpack.c.b16 %v2047, %v2045
        %v2106 = vpack.c.b16 %v2048, %v2046
        %v2107 = vpack.c.b16 %v2051, %v2049
        %v2108 = vpack.c.b16 %v2052, %v2050
        %v2109 = vpack.c.b16 %v2055, %v2053
        %v2110 = vpack.c.b16 %v2056, %v2054
        %v2111 = vpack.c.b16 %v2059, %v2057
        %v2112 = vpack.c.b16 %v2060, %v2058
        %v2113 = vpack.c.b16 %v2063, %v2061
        %v2114 = vpack.c.b16 %v2064, %v2062
        %v2115 = vpack.c.b16 %v2067, %v2065
        %v2116 = vpack.c.b16 %v2068, %v2066
        %v2117 = vpack.c.b16 %v2071, %v2069
        %v2118 = vpack.c.b16 %v2072, %v2070
        %v2119 = vpack.c.b16 %v2075, %v2073
        %v2120 = vpack.c.b16 %v2076, %v2074
        %v2121 = vpack.c.b16 %v2079, %v2077
        %v2122 = vpack.c.b16 %v2080, %v2078
        %v2123 = vpack.c.b16 %v2083, %v2081
        %v2124 = vpack.c.b16 %v2084, %v2082
        %v2125 = vpack.c.b16 %v2087, %v2085
        %v2126 = vpack.c.b16 %v2088, %v2086
        %v2127 = vpack.c.b16 %v2091, %v2089
        %v2128 = vpack.c.b16 %v2092, %v2090
        %v2129 = vpack.c.b16 %v2095, %v2093
        %v2130 = vpack.c.b16 %v2096, %v2094
        %v2131 = vpack.c.b16 %v2099, %v2097
        %v2132 = vpack.c.b16 %v2100, %v2098
        %2165 = vmatprep.subr.bf16.mxu0 %v2102
        %2166 = vmatpush1.bf16.msra.mxu0 %v2101
        %2167 = vmatprep.subr.bf16.mxu0 %v2104
        %2168 = vmatpush1.bf16.msra.mxu0 %v2103
        %2169 = vmatprep.subr.bf16.mxu0 %v2106
        %2170 = vmatpush1.bf16.msra.mxu0 %v2105
        %2171 = vmatprep.subr.bf16.mxu0 %v2108
        %2172 = vmatpush1.bf16.msra.mxu0 %v2107
        %2173 = vmatprep.subr.bf16.mxu0 %v2110
        %2174 = vmatpush1.bf16.msra.mxu0 %v2109
        %2175 = vmatprep.subr.bf16.mxu0 %v2112
        %2176 = vmatpush1.bf16.msra.mxu0 %v2111
        %2177 = vmatprep.subr.bf16.mxu0 %v2114
        %2178 = vmatpush1.bf16.msra.mxu0 %v2113
        %2179 = vmatprep.subr.bf16.mxu0 %v2116
        %2180 = vmatpush1.bf16.msra.mxu0 %v2115
        %2181 = vmatprep.subr.bf16.mxu0 %v2118
        %2182 = vmatpush1.bf16.msra.mxu0 %v2117
        %2183 = vmatprep.subr.bf16.mxu0 %v2120
        %2184 = vmatpush1.bf16.msra.mxu0 %v2119
        %2185 = vmatprep.subr.bf16.mxu0 %v2122
        %2186 = vmatpush1.bf16.msra.mxu0 %v2121
        %2187 = vmatprep.subr.bf16.mxu0 %v2124
        %2188 = vmatpush1.bf16.msra.mxu0 %v2123
        %2189 = vmatprep.subr.bf16.mxu0 %v2126
        %2190 = vmatpush1.bf16.msra.mxu0 %v2125
        %2191 = vmatprep.subr.bf16.mxu0 %v2128
        %2192 = vmatpush1.bf16.msra.mxu0 %v2127
        %2193 = vmatprep.subr.bf16.mxu0 %v2130
        %2194 = vmatpush1.bf16.msra.mxu0 %v2129
        %2195 = vmatprep.subr.bf16.mxu0 %v2132
        %2196 = vmatpush1.bf16.msra.mxu0 %v2131
        %2197 = vmatprep.mubr.bf16.mxu0 %v1944
        %2198 = vmatmul.mubr.bf16.gmra.mrb[0].mxu0 %v1943
        %v2199 = vpop.f32.mrb[0].mxu0
        %v2200 = vadd.f32 %v1998, %v2199
        %v2201 = vpop.f32.mrb[0].mxu0
        %v2202 = vadd.f32 %v2002, %v2201
        %v2203 = vpop.f32.mrb[0].mxu0
        %v2204 = vadd.f32 %v1998, %v2203
        %v2205 = vpop.f32.mrb[0].mxu0
        %v2206 = vadd.f32 %v2002, %v2205
        %2207 = vmatprep.mubr.bf16.mxu0 %v1946
        %2208 = vmatmul.mubr.bf16.gmra.mrb[0].mxu0 %v1945
        %v2209 = vpop.f32.mrb[0].mxu0
        %v2210 = vadd.f32 %v1998, %v2209
        %v2211 = vpop.f32.mrb[0].mxu0
        %v2212 = vadd.f32 %v2002, %v2211
        %v2213 = vpop.f32.mrb[0].mxu0
        %v2214 = vadd.f32 %v1998, %v2213
        %v2215 = vpop.f32.mrb[0].mxu0
        %v2216 = vadd.f32 %v2002, %v2215
        %2217 = vmatprep.mubr.bf16.mxu0 %v1948
        %2218 = vmatmul.mubr.bf16.gmra.mrb[0].mxu0 %v1947
        %v2219 = vpop.f32.mrb[0].mxu0
        %v2220 = vadd.f32 %v1998, %v2219
        %v2221 = vpop.f32.mrb[0].mxu0
        %v2222 = vadd.f32 %v2002, %v2221
        %v2223 = vpop.f32.mrb[0].mxu0
        %v2224 = vadd.f32 %v1998, %v2223
        %v2225 = vpop.f32.mrb[0].mxu0
        %v2226 = vadd.f32 %v2002, %v2225
        %2227 = vmatprep.mubr.bf16.mxu0 %v1950
        %2228 = vmatmul.mubr.bf16.gmra.mrb[0].mxu0 %v1949
        %v2229 = vpop.f32.mrb[0].mxu0
        %v2230 = vadd.f32 %v1998, %v2229
        %v2231 = vpop.f32.mrb[0].mxu0
        %v2232 = vadd.f32 %v2002, %v2231
        %v2233 = vpop.f32.mrb[0].mxu0
        %v2234 = vadd.f32 %v1998, %v2233
        %v2235 = vpop.f32.mrb[0].mxu0
        %v2236 = vadd.f32 %v2002, %v2235
        %2237 = vmatprep.mubr.bf16.mxu0 %v1952
        %2238 = vmatmul.mubr.bf16.gmra.mrb[0].mxu0 %v1951
        %v2239 = vpop.f32.mrb[0].mxu0
        %v2240 = vadd.f32 %v1998, %v2239
        %v2241 = vpop.f32.mrb[0].mxu0
        %v2242 = vadd.f32 %v2002, %v2241
        %v2243 = vpop.f32.mrb[0].mxu0
        %v2244 = vadd.f32 %v1998, %v2243
        %v2245 = vpop.f32.mrb[0].mxu0
        %v2246 = vadd.f32 %v2002, %v2245
        %2247 = vmatprep.mubr.bf16.mxu0 %v1954
        %2248 = vmatmul.mubr.bf16.gmra.mrb[0].mxu0 %v1953
        %v2249 = vpop.f32.mrb[0].mxu0
        %v2250 = vadd.f32 %v1998, %v2249
        %v2251 = vpop.f32.mrb[0].mxu0
        %v2252 = vadd.f32 %v2002, %v2251
        %v2253 = vpop.f32.mrb[0].mxu0
        %v2254 = vadd.f32 %v1998, %v2253
        %v2255 = vpop.f32.mrb[0].mxu0
        %v2256 = vadd.f32 %v2002, %v2255
        %2257 = vmatprep.mubr.bf16.mxu0 %v1956
        %2258 = vmatmul.mubr.bf16.gmra.mrb[0].mxu0 %v1955
        %v2259 = vpop.f32.mrb[0].mxu0
        %v2260 = vadd.f32 %v1998, %v2259
        %v2261 = vpop.f32.mrb[0].mxu0
        %v2262 = vadd.f32 %v2002, %v2261
        %v2263 = vpop.f32.mrb[0].mxu0
        %v2264 = vadd.f32 %v1998, %v2263
        %v2265 = vpop.f32.mrb[0].mxu0
        %v2266 = vadd.f32 %v2002, %v2265
        %2267 = vmatprep.mubr.bf16.mxu0 %v1958
        %2268 = vmatmul.mubr.bf16.gmra.mrb[0].mxu0 %v1957
        %v2269 = vpop.f32.mrb[0].mxu0
        %v2270 = vadd.f32 %v1998, %v2269
        %v2271 = vpop.f32.mrb[0].mxu0
        %v2272 = vadd.f32 %v2002, %v2271
        %v2273 = vpop.f32.mrb[0].mxu0
        %v2274 = vadd.f32 %v1998, %v2273
        %v2275 = vpop.f32.mrb[0].mxu0
        %v2276 = vadd.f32 %v2002, %v2275
        %2277 = vdwg.mxu0
        %v2278 = vpack.c.bf16 %v2204, %v2200
        %v2279 = vpack.c.bf16 %v2206, %v2202
        %v2280 = vpack.c.bf16 %v2214, %v2210
        %v2281 = vpack.c.bf16 %v2216, %v2212
        %v2282 = vpack.c.bf16 %v2224, %v2220
        %v2283 = vpack.c.bf16 %v2226, %v2222
        %v2284 = vpack.c.bf16 %v2234, %v2230
        %v2285 = vpack.c.bf16 %v2236, %v2232
        %v2286 = vpack.c.bf16 %v2244, %v2240
        %v2287 = vpack.c.bf16 %v2246, %v2242
        %v2288 = vpack.c.bf16 %v2254, %v2250
        %v2289 = vpack.c.bf16 %v2256, %v2252
        %v2290 = vpack.c.bf16 %v2264, %v2260
        %v2291 = vpack.c.bf16 %v2266, %v2262
        %v2292 = vpack.c.bf16 %v2274, %v2270
        %v2293 = vpack.c.bf16 %v2276, %v2272
        %s2294 = scalar_lea.vmem [#allocation2], 1536
        %v2295 = vld [vmem:[%s2294] sm:$0xff]
        %v2296 = vld [vmem:[%s2294 + $0x8] sm:$0xff]
        %v2297 = vld [vmem:[%s2294 + $0x10] sm:$0xff]
        %v2298 = vld [vmem:[%s2294 + $0x18] sm:$0xff]
        %v2299 = vld [vmem:[%s2294 + $0x20] sm:$0xff]
        %v2300 = vld [vmem:[%s2294 + $0x28] sm:$0xff]
        %v2301 = vld [vmem:[%s2294 + $0x30] sm:$0xff]
        %v2302 = vld [vmem:[%s2294 + $0x38] sm:$0xff]
        %v2303 = vld [vmem:[%s2294 + $0x40] sm:$0xff]
        %v2304 = vld [vmem:[%s2294 + $0x48] sm:$0xff]
        %v2305 = vld [vmem:[%s2294 + $0x50] sm:$0xff]
        %v2306 = vld [vmem:[%s2294 + $0x58] sm:$0xff]
        %v2307 = vld [vmem:[%s2294 + $0x60] sm:$0xff]
        %v2308 = vld [vmem:[%s2294 + $0x68] sm:$0xff]
        %v2309 = vld [vmem:[%s2294 + $0x70] sm:$0xff]
        %v2310 = vld [vmem:[%s2294 + $0x78] sm:$0xff]
        %v2311 = vld [vmem:[%s2294 + $0x80] sm:$0xff]
        %v2312 = vld [vmem:[%s2294 + $0x88] sm:$0xff]
        %v2313 = vld [vmem:[%s2294 + $0x90] sm:$0xff]
        %v2314 = vld [vmem:[%s2294 + $0x98] sm:$0xff]
        %v2315 = vld [vmem:[%s2294 + $0xa0] sm:$0xff]
        %v2316 = vld [vmem:[%s2294 + $0xa8] sm:$0xff]
        %v2317 = vld [vmem:[%s2294 + $0xb0] sm:$0xff]
        %v2318 = vld [vmem:[%s2294 + $0xb8] sm:$0xff]
        %v2319 = vld [vmem:[%s2294 + $0xc0] sm:$0xff]
        %v2320 = vld [vmem:[%s2294 + $0xc8] sm:$0xff]
        %v2321 = vld [vmem:[%s2294 + $0xd0] sm:$0xff]
        %v2322 = vld [vmem:[%s2294 + $0xd8] sm:$0xff]
        %v2323 = vld [vmem:[%s2294 + $0xe0] sm:$0xff]
        %v2324 = vld [vmem:[%s2294 + $0xe8] sm:$0xff]
        %v2325 = vld [vmem:[%s2294 + $0xf0] sm:$0xff]
        %v2326 = vld [vmem:[%s2294 + $0xf8] sm:$0xff]
        %s2327 = scalar_lea.vmem %s2, 12
        %v2328 = vld [vmem:[%s2327] sm:$0x3]
        %v2330 = vlaneseq
        %v2331 = vshrl.u32 %v2330, 7
        %v2332 = vsub.s32 0, %v2331
        %v2333 = vrot.slane %v2328, %v2332
        %v2334 = vlaneseq
        %v2335 = vshrl.u32 %v2334, 7
        %v2336 = vsub.s32 1, %v2335
        %v2337 = vrot.slane %v2328, %v2336
        %v2372 = vunpack.c.l.b16 %v2295
        %v2373 = vunpack.c.h.b16 %v2295
        %v2374 = vunpack.c.l.b16 %v2296
        %v2375 = vunpack.c.h.b16 %v2296
        %v2376 = vunpack.c.l.b16 %v2297
        %v2377 = vunpack.c.h.b16 %v2297
        %v2378 = vunpack.c.l.b16 %v2298
        %v2379 = vunpack.c.h.b16 %v2298
        %v2380 = vunpack.c.l.b16 %v2299
        %v2381 = vunpack.c.h.b16 %v2299
        %v2382 = vunpack.c.l.b16 %v2300
        %v2383 = vunpack.c.h.b16 %v2300
        %v2384 = vunpack.c.l.b16 %v2301
        %v2385 = vunpack.c.h.b16 %v2301
        %v2386 = vunpack.c.l.b16 %v2302
        %v2387 = vunpack.c.h.b16 %v2302
        %v2388 = vunpack.c.l.b16 %v2303
        %v2389 = vunpack.c.h.b16 %v2303
        %v2390 = vunpack.c.l.b16 %v2304
        %v2391 = vunpack.c.h.b16 %v2304
        %v2392 = vunpack.c.l.b16 %v2305
        %v2393 = vunpack.c.h.b16 %v2305
        %v2394 = vunpack.c.l.b16 %v2306
        %v2395 = vunpack.c.h.b16 %v2306
        %v2396 = vunpack.c.l.b16 %v2307
        %v2397 = vunpack.c.h.b16 %v2307
        %v2398 = vunpack.c.l.b16 %v2308
        %v2399 = vunpack.c.h.b16 %v2308
        %v2400 = vunpack.c.l.b16 %v2309
        %v2401 = vunpack.c.h.b16 %v2309
        %v2402 = vunpack.c.l.b16 %v2310
        %v2403 = vunpack.c.h.b16 %v2310
        %v2404 = vunpack.c.l.b16 %v2311
        %v2405 = vunpack.c.h.b16 %v2311
        %v2406 = vunpack.c.l.b16 %v2312
        %v2407 = vunpack.c.h.b16 %v2312
        %v2408 = vunpack.c.l.b16 %v2313
        %v2409 = vunpack.c.h.b16 %v2313
        %v2410 = vunpack.c.l.b16 %v2314
        %v2411 = vunpack.c.h.b16 %v2314
        %v2412 = vunpack.c.l.b16 %v2315
        %v2413 = vunpack.c.h.b16 %v2315
        %v2414 = vunpack.c.l.b16 %v2316
        %v2415 = vunpack.c.h.b16 %v2316
        %v2416 = vunpack.c.l.b16 %v2317
        %v2417 = vunpack.c.h.b16 %v2317
        %v2418 = vunpack.c.l.b16 %v2318
        %v2419 = vunpack.c.h.b16 %v2318
        %v2420 = vunpack.c.l.b16 %v2319
        %v2421 = vunpack.c.h.b16 %v2319
        %v2422 = vunpack.c.l.b16 %v2320
        %v2423 = vunpack.c.h.b16 %v2320
        %v2424 = vunpack.c.l.b16 %v2321
        %v2425 = vunpack.c.h.b16 %v2321
        %v2426 = vunpack.c.l.b16 %v2322
        %v2427 = vunpack.c.h.b16 %v2322
        %v2428 = vunpack.c.l.b16 %v2323
        %v2429 = vunpack.c.h.b16 %v2323
        %v2430 = vunpack.c.l.b16 %v2324
        %v2431 = vunpack.c.h.b16 %v2324
        %v2432 = vunpack.c.l.b16 %v2325
        %v2433 = vunpack.c.h.b16 %v2325
        %v2434 = vunpack.c.l.b16 %v2326
        %v2435 = vunpack.c.h.b16 %v2326
        %v2436 = vpack.c.b16 %v2374, %v2372
        %v2437 = vpack.c.b16 %v2375, %v2373
        %v2438 = vpack.c.b16 %v2378, %v2376
        %v2439 = vpack.c.b16 %v2379, %v2377
        %v2440 = vpack.c.b16 %v2382, %v2380
        %v2441 = vpack.c.b16 %v2383, %v2381
        %v2442 = vpack.c.b16 %v2386, %v2384
        %v2443 = vpack.c.b16 %v2387, %v2385
        %v2444 = vpack.c.b16 %v2390, %v2388
        %v2445 = vpack.c.b16 %v2391, %v2389
        %v2446 = vpack.c.b16 %v2394, %v2392
        %v2447 = vpack.c.b16 %v2395, %v2393
        %v2448 = vpack.c.b16 %v2398, %v2396
        %v2449 = vpack.c.b16 %v2399, %v2397
        %v2450 = vpack.c.b16 %v2402, %v2400
        %v2451 = vpack.c.b16 %v2403, %v2401
        %v2452 = vpack.c.b16 %v2406, %v2404
        %v2453 = vpack.c.b16 %v2407, %v2405
        %v2454 = vpack.c.b16 %v2410, %v2408
        %v2455 = vpack.c.b16 %v2411, %v2409
        %v2456 = vpack.c.b16 %v2414, %v2412
        %v2457 = vpack.c.b16 %v2415, %v2413
        %v2458 = vpack.c.b16 %v2418, %v2416
        %v2459 = vpack.c.b16 %v2419, %v2417
        %v2460 = vpack.c.b16 %v2422, %v2420
        %v2461 = vpack.c.b16 %v2423, %v2421
        %v2462 = vpack.c.b16 %v2426, %v2424
        %v2463 = vpack.c.b16 %v2427, %v2425
        %v2464 = vpack.c.b16 %v2430, %v2428
        %v2465 = vpack.c.b16 %v2431, %v2429
        %v2466 = vpack.c.b16 %v2434, %v2432
        %v2467 = vpack.c.b16 %v2435, %v2433
        %2500 = vmatprep.subr.bf16.mxu0 %v2437
        %2501 = vmatpush1.bf16.msra.mxu0 %v2436
        %2502 = vmatprep.subr.bf16.mxu0 %v2439
        %2503 = vmatpush1.bf16.msra.mxu0 %v2438
        %2504 = vmatprep.subr.bf16.mxu0 %v2441
        %2505 = vmatpush1.bf16.msra.mxu0 %v2440
        %2506 = vmatprep.subr.bf16.mxu0 %v2443
        %2507 = vmatpush1.bf16.msra.mxu0 %v2442
        %2508 = vmatprep.subr.bf16.mxu0 %v2445
        %2509 = vmatpush1.bf16.msra.mxu0 %v2444
        %2510 = vmatprep.subr.bf16.mxu0 %v2447
        %2511 = vmatpush1.bf16.msra.mxu0 %v2446
        %2512 = vmatprep.subr.bf16.mxu0 %v2449
        %2513 = vmatpush1.bf16.msra.mxu0 %v2448
        %2514 = vmatprep.subr.bf16.mxu0 %v2451
        %2515 = vmatpush1.bf16.msra.mxu0 %v2450
        %2516 = vmatprep.subr.bf16.mxu0 %v2453
        %2517 = vmatpush1.bf16.msra.mxu0 %v2452
        %2518 = vmatprep.subr.bf16.mxu0 %v2455
        %2519 = vmatpush1.bf16.msra.mxu0 %v2454
        %2520 = vmatprep.subr.bf16.mxu0 %v2457
        %2521 = vmatpush1.bf16.msra.mxu0 %v2456
        %2522 = vmatprep.subr.bf16.mxu0 %v2459
        %2523 = vmatpush1.bf16.msra.mxu0 %v2458
        %2524 = vmatprep.subr.bf16.mxu0 %v2461
        %2525 = vmatpush1.bf16.msra.mxu0 %v2460
        %2526 = vmatprep.subr.bf16.mxu0 %v2463
        %2527 = vmatpush1.bf16.msra.mxu0 %v2462
        %2528 = vmatprep.subr.bf16.mxu0 %v2465
        %2529 = vmatpush1.bf16.msra.mxu0 %v2464
        %2530 = vmatprep.subr.bf16.mxu0 %v2467
        %2531 = vmatpush1.bf16.msra.mxu0 %v2466
        %2532 = vmatprep.mubr.bf16.mxu0 %v2279
        %2533 = vmatmul.mubr.bf16.gmra.mrb[0].mxu0 %v2278
        %v2534 = vpop.f32.mrb[0].mxu0
        %v2535 = vadd.f32 %v2333, %v2534
        %v2536 = vpop.f32.mrb[0].mxu0
        %v2537 = vadd.f32 %v2337, %v2536
        %v2538 = vpop.f32.mrb[0].mxu0
        %v2539 = vadd.f32 %v2333, %v2538
        %v2540 = vpop.f32.mrb[0].mxu0
        %v2541 = vadd.f32 %v2337, %v2540
        %2542 = vmatprep.mubr.bf16.mxu0 %v2281
        %2543 = vmatmul.mubr.bf16.gmra.mrb[0].mxu0 %v2280
        %v2544 = vpop.f32.mrb[0].mxu0
        %v2545 = vadd.f32 %v2333, %v2544
        %v2546 = vpop.f32.mrb[0].mxu0
        %v2547 = vadd.f32 %v2337, %v2546
        %v2548 = vpop.f32.mrb[0].mxu0
        %v2549 = vadd.f32 %v2333, %v2548
        %v2550 = vpop.f32.mrb[0].mxu0
        %v2551 = vadd.f32 %v2337, %v2550
        %2552 = vmatprep.mubr.bf16.mxu0 %v2283
        %2553 = vmatmul.mubr.bf16.gmra.mrb[0].mxu0 %v2282
        %v2554 = vpop.f32.mrb[0].mxu0
        %v2555 = vadd.f32 %v2333, %v2554
        %v2556 = vpop.f32.mrb[0].mxu0
        %v2557 = vadd.f32 %v2337, %v2556
        %v2558 = vpop.f32.mrb[0].mxu0
        %v2559 = vadd.f32 %v2333, %v2558
        %v2560 = vpop.f32.mrb[0].mxu0
        %v2561 = vadd.f32 %v2337, %v2560
        %2562 = vmatprep.mubr.bf16.mxu0 %v2285
        %2563 = vmatmul.mubr.bf16.gmra.mrb[0].mxu0 %v2284
        %v2564 = vpop.f32.mrb[0].mxu0
        %v2565 = vadd.f32 %v2333, %v2564
        %v2566 = vpop.f32.mrb[0].mxu0
        %v2567 = vadd.f32 %v2337, %v2566
        %v2568 = vpop.f32.mrb[0].mxu0
        %v2569 = vadd.f32 %v2333, %v2568
        %v2570 = vpop.f32.mrb[0].mxu0
        %v2571 = vadd.f32 %v2337, %v2570
        %2572 = vmatprep.mubr.bf16.mxu0 %v2287
        %2573 = vmatmul.mubr.bf16.gmra.mrb[0].mxu0 %v2286
        %v2574 = vpop.f32.mrb[0].mxu0
        %v2575 = vadd.f32 %v2333, %v2574
        %v2576 = vpop.f32.mrb[0].mxu0
        %v2577 = vadd.f32 %v2337, %v2576
        %v2578 = vpop.f32.mrb[0].mxu0
        %v2579 = vadd.f32 %v2333, %v2578
        %v2580 = vpop.f32.mrb[0].mxu0
        %v2581 = vadd.f32 %v2337, %v2580
        %2582 = vmatprep.mubr.bf16.mxu0 %v2289
        %2583 = vmatmul.mubr.bf16.gmra.mrb[0].mxu0 %v2288
        %v2584 = vpop.f32.mrb[0].mxu0
        %v2585 = vadd.f32 %v2333, %v2584
        %v2586 = vpop.f32.mrb[0].mxu0
        %v2587 = vadd.f32 %v2337, %v2586
        %v2588 = vpop.f32.mrb[0].mxu0
        %v2589 = vadd.f32 %v2333, %v2588
        %v2590 = vpop.f32.mrb[0].mxu0
        %v2591 = vadd.f32 %v2337, %v2590
        %2592 = vmatprep.mubr.bf16.mxu0 %v2291
        %2593 = vmatmul.mubr.bf16.gmra.mrb[0].mxu0 %v2290
        %v2594 = vpop.f32.mrb[0].mxu0
        %v2595 = vadd.f32 %v2333, %v2594
        %v2596 = vpop.f32.mrb[0].mxu0
        %v2597 = vadd.f32 %v2337, %v2596
        %v2598 = vpop.f32.mrb[0].mxu0
        %v2599 = vadd.f32 %v2333, %v2598
        %v2600 = vpop.f32.mrb[0].mxu0
        %v2601 = vadd.f32 %v2337, %v2600
        %2602 = vmatprep.mubr.bf16.mxu0 %v2293
        %2603 = vmatmul.mubr.bf16.gmra.mrb[0].mxu0 %v2292
        %v2604 = vpop.f32.mrb[0].mxu0
        %v2605 = vadd.f32 %v2333, %v2604
        %v2606 = vpop.f32.mrb[0].mxu0
        %v2607 = vadd.f32 %v2337, %v2606
        %v2608 = vpop.f32.mrb[0].mxu0
        %v2609 = vadd.f32 %v2333, %v2608
        %v2610 = vpop.f32.mrb[0].mxu0
        %v2611 = vadd.f32 %v2337, %v2610
        %2612 = vdwg.mxu0
        %v2613 = vpack.c.bf16 %v2539, %v2535
        %v2614 = vpack.c.bf16 %v2541, %v2537
        %v2615 = vpack.c.bf16 %v2549, %v2545
        %v2616 = vpack.c.bf16 %v2551, %v2547
        %v2617 = vpack.c.bf16 %v2559, %v2555
        %v2618 = vpack.c.bf16 %v2561, %v2557
        %v2619 = vpack.c.bf16 %v2569, %v2565
        %v2620 = vpack.c.bf16 %v2571, %v2567
        %v2621 = vpack.c.bf16 %v2579, %v2575
        %v2622 = vpack.c.bf16 %v2581, %v2577
        %v2623 = vpack.c.bf16 %v2589, %v2585
        %v2624 = vpack.c.bf16 %v2591, %v2587
        %v2625 = vpack.c.bf16 %v2599, %v2595
        %v2626 = vpack.c.bf16 %v2601, %v2597
        %v2627 = vpack.c.bf16 %v2609, %v2605
        %v2628 = vpack.c.bf16 %v2611, %v2607
        %s2629 = scalar_lea.vmem [#allocation2], 1792
        %v2630 = vld [vmem:[%s2629] sm:$0xff]
        %v2631 = vld [vmem:[%s2629 + $0x8] sm:$0xff]
        %v2632 = vld [vmem:[%s2629 + $0x10] sm:$0xff]
        %v2633 = vld [vmem:[%s2629 + $0x18] sm:$0xff]
        %v2634 = vld [vmem:[%s2629 + $0x20] sm:$0xff]
        %v2635 = vld [vmem:[%s2629 + $0x28] sm:$0xff]
        %v2636 = vld [vmem:[%s2629 + $0x30] sm:$0xff]
        %v2637 = vld [vmem:[%s2629 + $0x38] sm:$0xff]
        %v2638 = vld [vmem:[%s2629 + $0x40] sm:$0xff]
        %v2639 = vld [vmem:[%s2629 + $0x48] sm:$0xff]
        %v2640 = vld [vmem:[%s2629 + $0x50] sm:$0xff]
        %v2641 = vld [vmem:[%s2629 + $0x58] sm:$0xff]
        %v2642 = vld [vmem:[%s2629 + $0x60] sm:$0xff]
        %v2643 = vld [vmem:[%s2629 + $0x68] sm:$0xff]
        %v2644 = vld [vmem:[%s2629 + $0x70] sm:$0xff]
        %v2645 = vld [vmem:[%s2629 + $0x78] sm:$0xff]
        %v2646 = vld [vmem:[%s2629 + $0x80] sm:$0xff]
        %v2647 = vld [vmem:[%s2629 + $0x88] sm:$0xff]
        %v2648 = vld [vmem:[%s2629 + $0x90] sm:$0xff]
        %v2649 = vld [vmem:[%s2629 + $0x98] sm:$0xff]
        %v2650 = vld [vmem:[%s2629 + $0xa0] sm:$0xff]
        %v2651 = vld [vmem:[%s2629 + $0xa8] sm:$0xff]
        %v2652 = vld [vmem:[%s2629 + $0xb0] sm:$0xff]
        %v2653 = vld [vmem:[%s2629 + $0xb8] sm:$0xff]
        %v2654 = vld [vmem:[%s2629 + $0xc0] sm:$0xff]
        %v2655 = vld [vmem:[%s2629 + $0xc8] sm:$0xff]
        %v2656 = vld [vmem:[%s2629 + $0xd0] sm:$0xff]
        %v2657 = vld [vmem:[%s2629 + $0xd8] sm:$0xff]
        %v2658 = vld [vmem:[%s2629 + $0xe0] sm:$0xff]
        %v2659 = vld [vmem:[%s2629 + $0xe8] sm:$0xff]
        %v2660 = vld [vmem:[%s2629 + $0xf0] sm:$0xff]
        %v2661 = vld [vmem:[%s2629 + $0xf8] sm:$0xff]
        %s2662 = scalar_lea.vmem %s2, 14
        %v2663 = vld [vmem:[%s2662] sm:$0x3]
        %v2665 = vlaneseq
        %v2666 = vshrl.u32 %v2665, 7
        %v2667 = vsub.s32 0, %v2666
        %v2668 = vrot.slane %v2663, %v2667
        %v2669 = vlaneseq
        %v2670 = vshrl.u32 %v2669, 7
        %v2671 = vsub.s32 1, %v2670
        %v2672 = vrot.slane %v2663, %v2671
        %v2707 = vunpack.c.l.b16 %v2630
        %v2708 = vunpack.c.h.b16 %v2630
        %v2709 = vunpack.c.l.b16 %v2631
        %v2710 = vunpack.c.h.b16 %v2631
        %v2711 = vunpack.c.l.b16 %v2632
        %v2712 = vunpack.c.h.b16 %v2632
        %v2713 = vunpack.c.l.b16 %v2633
        %v2714 = vunpack.c.h.b16 %v2633
        %v2715 = vunpack.c.l.b16 %v2634
        %v2716 = vunpack.c.h.b16 %v2634
        %v2717 = vunpack.c.l.b16 %v2635
        %v2718 = vunpack.c.h.b16 %v2635
        %v2719 = vunpack.c.l.b16 %v2636
        %v2720 = vunpack.c.h.b16 %v2636
        %v2721 = vunpack.c.l.b16 %v2637
        %v2722 = vunpack.c.h.b16 %v2637
        %v2723 = vunpack.c.l.b16 %v2638
        %v2724 = vunpack.c.h.b16 %v2638
        %v2725 = vunpack.c.l.b16 %v2639
        %v2726 = vunpack.c.h.b16 %v2639
        %v2727 = vunpack.c.l.b16 %v2640
        %v2728 = vunpack.c.h.b16 %v2640
        %v2729 = vunpack.c.l.b16 %v2641
        %v2730 = vunpack.c.h.b16 %v2641
        %v2731 = vunpack.c.l.b16 %v2642
        %v2732 = vunpack.c.h.b16 %v2642
        %v2733 = vunpack.c.l.b16 %v2643
        %v2734 = vunpack.c.h.b16 %v2643
        %v2735 = vunpack.c.l.b16 %v2644
        %v2736 = vunpack.c.h.b16 %v2644
        %v2737 = vunpack.c.l.b16 %v2645
        %v2738 = vunpack.c.h.b16 %v2645
        %v2739 = vunpack.c.l.b16 %v2646
        %v2740 = vunpack.c.h.b16 %v2646
        %v2741 = vunpack.c.l.b16 %v2647
        %v2742 = vunpack.c.h.b16 %v2647
        %v2743 = vunpack.c.l.b16 %v2648
        %v2744 = vunpack.c.h.b16 %v2648
        %v2745 = vunpack.c.l.b16 %v2649
        %v2746 = vunpack.c.h.b16 %v2649
        %v2747 = vunpack.c.l.b16 %v2650
        %v2748 = vunpack.c.h.b16 %v2650
        %v2749 = vunpack.c.l.b16 %v2651
        %v2750 = vunpack.c.h.b16 %v2651
        %v2751 = vunpack.c.l.b16 %v2652
        %v2752 = vunpack.c.h.b16 %v2652
        %v2753 = vunpack.c.l.b16 %v2653
        %v2754 = vunpack.c.h.b16 %v2653
        %v2755 = vunpack.c.l.b16 %v2654
        %v2756 = vunpack.c.h.b16 %v2654
        %v2757 = vunpack.c.l.b16 %v2655
        %v2758 = vunpack.c.h.b16 %v2655
        %v2759 = vunpack.c.l.b16 %v2656
        %v2760 = vunpack.c.h.b16 %v2656
        %v2761 = vunpack.c.l.b16 %v2657
        %v2762 = vunpack.c.h.b16 %v2657
        %v2763 = vunpack.c.l.b16 %v2658
        %v2764 = vunpack.c.h.b16 %v2658
        %v2765 = vunpack.c.l.b16 %v2659
        %v2766 = vunpack.c.h.b16 %v2659
        %v2767 = vunpack.c.l.b16 %v2660
        %v2768 = vunpack.c.h.b16 %v2660
        %v2769 = vunpack.c.l.b16 %v2661
        %v2770 = vunpack.c.h.b16 %v2661
        %v2771 = vpack.c.b16 %v2709, %v2707
        %v2772 = vpack.c.b16 %v2710, %v2708
        %v2773 = vpack.c.b16 %v2713, %v2711
        %v2774 = vpack.c.b16 %v2714, %v2712
        %v2775 = vpack.c.b16 %v2717, %v2715
        %v2776 = vpack.c.b16 %v2718, %v2716
        %v2777 = vpack.c.b16 %v2721, %v2719
        %v2778 = vpack.c.b16 %v2722, %v2720
        %v2779 = vpack.c.b16 %v2725, %v2723
        %v2780 = vpack.c.b16 %v2726, %v2724
        %v2781 = vpack.c.b16 %v2729, %v2727
        %v2782 = vpack.c.b16 %v2730, %v2728
        %v2783 = vpack.c.b16 %v2733, %v2731
        %v2784 = vpack.c.b16 %v2734, %v2732
        %v2785 = vpack.c.b16 %v2737, %v2735
        %v2786 = vpack.c.b16 %v2738, %v2736
        %v2787 = vpack.c.b16 %v2741, %v2739
        %v2788 = vpack.c.b16 %v2742, %v2740
        %v2789 = vpack.c.b16 %v2745, %v2743
        %v2790 = vpack.c.b16 %v2746, %v2744
        %v2791 = vpack.c.b16 %v2749, %v2747
        %v2792 = vpack.c.b16 %v2750, %v2748
        %v2793 = vpack.c.b16 %v2753, %v2751
        %v2794 = vpack.c.b16 %v2754, %v2752
        %v2795 = vpack.c.b16 %v2757, %v2755
        %v2796 = vpack.c.b16 %v2758, %v2756
        %v2797 = vpack.c.b16 %v2761, %v2759
        %v2798 = vpack.c.b16 %v2762, %v2760
        %v2799 = vpack.c.b16 %v2765, %v2763
        %v2800 = vpack.c.b16 %v2766, %v2764
        %v2801 = vpack.c.b16 %v2769, %v2767
        %v2802 = vpack.c.b16 %v2770, %v2768
        %2835 = vmatprep.subr.bf16.mxu0 %v2772
        %2836 = vmatpush1.bf16.msra.mxu0 %v2771
        %2837 = vmatprep.subr.bf16.mxu0 %v2774
        %2838 = vmatpush1.bf16.msra.mxu0 %v2773
        %2839 = vmatprep.subr.bf16.mxu0 %v2776
        %2840 = vmatpush1.bf16.msra.mxu0 %v2775
        %2841 = vmatprep.subr.bf16.mxu0 %v2778
        %2842 = vmatpush1.bf16.msra.mxu0 %v2777
        %2843 = vmatprep.subr.bf16.mxu0 %v2780
        %2844 = vmatpush1.bf16.msra.mxu0 %v2779
        %2845 = vmatprep.subr.bf16.mxu0 %v2782
        %2846 = vmatpush1.bf16.msra.mxu0 %v2781
        %2847 = vmatprep.subr.bf16.mxu0 %v2784
        %2848 = vmatpush1.bf16.msra.mxu0 %v2783
        %2849 = vmatprep.subr.bf16.mxu0 %v2786
        %2850 = vmatpush1.bf16.msra.mxu0 %v2785
        %2851 = vmatprep.subr.bf16.mxu0 %v2788
        %2852 = vmatpush1.bf16.msra.mxu0 %v2787
        %2853 = vmatprep.subr.bf16.mxu0 %v2790
        %2854 = vmatpush1.bf16.msra.mxu0 %v2789
        %2855 = vmatprep.subr.bf16.mxu0 %v2792
        %2856 = vmatpush1.bf16.msra.mxu0 %v2791
        %2857 = vmatprep.subr.bf16.mxu0 %v2794
        %2858 = vmatpush1.bf16.msra.mxu0 %v2793
        %2859 = vmatprep.subr.bf16.mxu0 %v2796
        %2860 = vmatpush1.bf16.msra.mxu0 %v2795
        %2861 = vmatprep.subr.bf16.mxu0 %v2798
        %2862 = vmatpush1.bf16.msra.mxu0 %v2797
        %2863 = vmatprep.subr.bf16.mxu0 %v2800
        %2864 = vmatpush1.bf16.msra.mxu0 %v2799
        %2865 = vmatprep.subr.bf16.mxu0 %v2802
        %2866 = vmatpush1.bf16.msra.mxu0 %v2801
        %2867 = vmatprep.mubr.bf16.mxu0 %v2614
        %2868 = vmatmul.mubr.bf16.gmra.mrb[0].mxu0 %v2613
        %v2869 = vpop.f32.mrb[0].mxu0
        %v2870 = vadd.f32 %v2668, %v2869
        %v2871 = vpop.f32.mrb[0].mxu0
        %v2872 = vadd.f32 %v2672, %v2871
        %v2873 = vpop.f32.mrb[0].mxu0
        %v2874 = vadd.f32 %v2668, %v2873
        %v2875 = vpop.f32.mrb[0].mxu0
        %v2876 = vadd.f32 %v2672, %v2875
        %2877 = vmatprep.mubr.bf16.mxu0 %v2616
        %2878 = vmatmul.mubr.bf16.gmra.mrb[0].mxu0 %v2615
        %v2879 = vpop.f32.mrb[0].mxu0
        %v2880 = vadd.f32 %v2668, %v2879
        %v2881 = vpop.f32.mrb[0].mxu0
        %v2882 = vadd.f32 %v2672, %v2881
        %v2883 = vpop.f32.mrb[0].mxu0
        %v2884 = vadd.f32 %v2668, %v2883
        %v2885 = vpop.f32.mrb[0].mxu0
        %v2886 = vadd.f32 %v2672, %v2885
        %2887 = vmatprep.mubr.bf16.mxu0 %v2618
        %2888 = vmatmul.mubr.bf16.gmra.mrb[0].mxu0 %v2617
        %v2889 = vpop.f32.mrb[0].mxu0
        %v2890 = vadd.f32 %v2668, %v2889
        %v2891 = vpop.f32.mrb[0].mxu0
        %v2892 = vadd.f32 %v2672, %v2891
        %v2893 = vpop.f32.mrb[0].mxu0
        %v2894 = vadd.f32 %v2668, %v2893
        %v2895 = vpop.f32.mrb[0].mxu0
        %v2896 = vadd.f32 %v2672, %v2895
        %2897 = vmatprep.mubr.bf16.mxu0 %v2620
        %2898 = vmatmul.mubr.bf16.gmra.mrb[0].mxu0 %v2619
        %v2899 = vpop.f32.mrb[0].mxu0
        %v2900 = vadd.f32 %v2668, %v2899
        %v2901 = vpop.f32.mrb[0].mxu0
        %v2902 = vadd.f32 %v2672, %v2901
        %v2903 = vpop.f32.mrb[0].mxu0
        %v2904 = vadd.f32 %v2668, %v2903
        %v2905 = vpop.f32.mrb[0].mxu0
        %v2906 = vadd.f32 %v2672, %v2905
        %2907 = vmatprep.mubr.bf16.mxu0 %v2622
        %2908 = vmatmul.mubr.bf16.gmra.mrb[0].mxu0 %v2621
        %v2909 = vpop.f32.mrb[0].mxu0
        %v2910 = vadd.f32 %v2668, %v2909
        %v2911 = vpop.f32.mrb[0].mxu0
        %v2912 = vadd.f32 %v2672, %v2911
        %v2913 = vpop.f32.mrb[0].mxu0
        %v2914 = vadd.f32 %v2668, %v2913
        %v2915 = vpop.f32.mrb[0].mxu0
        %v2916 = vadd.f32 %v2672, %v2915
        %2917 = vmatprep.mubr.bf16.mxu0 %v2624
        %2918 = vmatmul.mubr.bf16.gmra.mrb[0].mxu0 %v2623
        %v2919 = vpop.f32.mrb[0].mxu0
        %v2920 = vadd.f32 %v2668, %v2919
        %v2921 = vpop.f32.mrb[0].mxu0
        %v2922 = vadd.f32 %v2672, %v2921
        %v2923 = vpop.f32.mrb[0].mxu0
        %v2924 = vadd.f32 %v2668, %v2923
        %v2925 = vpop.f32.mrb[0].mxu0
        %v2926 = vadd.f32 %v2672, %v2925
        %2927 = vmatprep.mubr.bf16.mxu0 %v2626
        %2928 = vmatmul.mubr.bf16.gmra.mrb[0].mxu0 %v2625
        %v2929 = vpop.f32.mrb[0].mxu0
        %v2930 = vadd.f32 %v2668, %v2929
        %v2931 = vpop.f32.mrb[0].mxu0
        %v2932 = vadd.f32 %v2672, %v2931
        %v2933 = vpop.f32.mrb[0].mxu0
        %v2934 = vadd.f32 %v2668, %v2933
        %v2935 = vpop.f32.mrb[0].mxu0
        %v2936 = vadd.f32 %v2672, %v2935
        %2937 = vmatprep.mubr.bf16.mxu0 %v2628
        %2938 = vmatmul.mubr.bf16.gmra.mrb[0].mxu0 %v2627
        %v2939 = vpop.f32.mrb[0].mxu0
        %v2940 = vadd.f32 %v2668, %v2939
        %v2941 = vpop.f32.mrb[0].mxu0
        %v2942 = vadd.f32 %v2672, %v2941
        %v2943 = vpop.f32.mrb[0].mxu0
        %v2944 = vadd.f32 %v2668, %v2943
        %v2945 = vpop.f32.mrb[0].mxu0
        %v2946 = vadd.f32 %v2672, %v2945
        %2947 = vdwg.mxu0
        %2948 = vst [vmem:[%s181] sm:$0xff] %v2870
        %2949 = vst [vmem:[%s181 + $0x8] sm:$0xff] %v2872
        %2950 = vst [vmem:[%s181 + $0x10] sm:$0xff] %v2874
        %2951 = vst [vmem:[%s181 + $0x18] sm:$0xff] %v2876
        %2952 = vst [vmem:[%s181 + $0x20] sm:$0xff] %v2880
        %2953 = vst [vmem:[%s181 + $0x28] sm:$0xff] %v2882
        %2954 = vst [vmem:[%s181 + $0x30] sm:$0xff] %v2884
        %2955 = vst [vmem:[%s181 + $0x38] sm:$0xff] %v2886
        %2956 = vst [vmem:[%s181 + $0x40] sm:$0xff] %v2890
        %2957 = vst [vmem:[%s181 + $0x48] sm:$0xff] %v2892
        %2958 = vst [vmem:[%s181 + $0x50] sm:$0xff] %v2894
        %2959 = vst [vmem:[%s181 + $0x58] sm:$0xff] %v2896
        %2960 = vst [vmem:[%s181 + $0x60] sm:$0xff] %v2900
        %2961 = vst [vmem:[%s181 + $0x68] sm:$0xff] %v2902
        %2962 = vst [vmem:[%s181 + $0x70] sm:$0xff] %v2904
        %2963 = vst [vmem:[%s181 + $0x78] sm:$0xff] %v2906
        %2964 = vst [vmem:[%s181 + $0x80] sm:$0xff] %v2910
        %2965 = vst [vmem:[%s181 + $0x88] sm:$0xff] %v2912
        %2966 = vst [vmem:[%s181 + $0x90] sm:$0xff] %v2914
        %2967 = vst [vmem:[%s181 + $0x98] sm:$0xff] %v2916
        %2968 = vst [vmem:[%s181 + $0xa0] sm:$0xff] %v2920
        %2969 = vst [vmem:[%s181 + $0xa8] sm:$0xff] %v2922
        %2970 = vst [vmem:[%s181 + $0xb0] sm:$0xff] %v2924
        %2971 = vst [vmem:[%s181 + $0xb8] sm:$0xff] %v2926
        %2972 = vst [vmem:[%s181 + $0xc0] sm:$0xff] %v2930
        %2973 = vst [vmem:[%s181 + $0xc8] sm:$0xff] %v2932
        %2974 = vst [vmem:[%s181 + $0xd0] sm:$0xff] %v2934
        %2975 = vst [vmem:[%s181 + $0xd8] sm:$0xff] %v2936
        %2976 = vst [vmem:[%s181 + $0xe0] sm:$0xff] %v2940
        %2977 = vst [vmem:[%s181 + $0xe8] sm:$0xff] %v2942
        %2978 = vst [vmem:[%s181 + $0xf0] sm:$0xff] %v2944
        %2979 = vst [vmem:[%s181 + $0xf8] sm:$0xff] %v2946
        %s2980 = sand.u32 %s94, 1
        %s2981 = scalar_lea.sflag [#allocation4], %s2980
        %s2982 = sand.u32 %s94, 1
        %s2983 = smul.addr %s2982, 256
        %s2984 = scalar_lea.vmem [#allocation5], %s2983
        // Predicated region
        $region37: #{_mlp_forward_padded.1} parent=31 // pred_check
          %p2985 = pneg %p104
        $region38: #{_mlp_forward_padded.1} parent=31 // pred_check_branch
          %2987 = sbr.rel (%p2985) target = $region40
        $region39: #{_mlp_forward_padded.1} parent=31 // pred_region
          %s2988 = smul.u32 16, %s18
          %s2990 = ssub.s32 4096, 4096
          %2991 = vsyncadd %s2981, %s2990
          %s2992 = smul.addr %s2988, 2
          %s2993 = smul.addr %s2992, 128
          %s2994 = scalar_lea.hbm %s3, %s2993
          %s2995 = sshll.u32 %s2984, 4
          %s2996 = int_to_ptr.vmem [resolvable:$true] %s2995
          %3001 = dma.vmem_to_hbm [thread:$0]  %s2996, 4096, %s2994, %s2981, 256, 256, 16
        $region40: #{_mlp_forward_padded.1} parent=31 // pred_fallthru
          _
      $region32: #{_mlp_forward_padded.1} parent=5 // pred_fallthru
        _
      %p3002 = scmp.le.s32.totalorder 2, %s13
      // Predicated region
      $region41: #{_mlp_forward_padded.1} parent=5 // pred_check
        %p3003 = pneg %p3002
      $region42: #{_mlp_forward_padded.1} parent=5 // pred_check_branch
        %3005 = sbr.rel (%p3003) target = $region44
      $region43: #{_mlp_forward_padded.1} parent=5 // pred_region
        %s3006 = ssub.s32 %s13, 2
        // Predicated region
        $region45: #{_mlp_forward_padded.1} parent=43 // pred_check
          %p3007 = pneg %p110
        $region46: #{_mlp_forward_padded.1} parent=43 // pred_check_branch
          %3009 = sbr.rel (%p3007) target = $region48
        $region47: #{_mlp_forward_padded.1} parent=43 // pred_region
          %s3010 = sand.u32 %s95, 1
          %s3011 = scalar_lea.sflag [#allocation4], %s3010
          %s3012 = sand.u32 %s95, 1
          %s3013 = smul.addr %s3012, 256
          %s3014 = scalar_lea.vmem [#allocation5], %s3013
          %3015 = dma.done %s3011, 4096
        $region48: #{_mlp_forward_padded.1} parent=43 // pred_fallthru
          _
      $region44: #{_mlp_forward_padded.1} parent=5 // pred_fallthru
        _
    $region6: #{_mlp_forward_padded.1} parent=1 // loop_footer
      %s17 = sadd.s32 1, %s13
    $region7: #{_mlp_forward_padded.1} parent=1 // loop_footer_branch
      %12 = sbr.rel target = $region3
    $region8: #{_mlp_forward_padded.1} parent=1 // loop_exit
      _
    %3016 = vsyncpa [#allocation3], 1
    %s3017 = scalar_lea.sflag [#allocation3], 1
    %3018 = vsyncpa %s3017, 1
    %3019 = vsyncpa [#allocation4], 1
    %s3020 = scalar_lea.sflag [#allocation4], 1
    %3021 = vsyncpa %s3020, 1

</llo_original>
